<compile_context>
chip_gen: v5e
topology: v5e:2x2
jax: 0.10.0
libtpu: 0.0.40
codegen_flags: <defaults>
</compile_context>

<pallas_src>
import functools

import jax
import jax.numpy as jnp
from jax.experimental import pallas as pl
from jax.experimental.pallas import tpu as pltpu


def _round_up(x, m):
    return ((x + m - 1) // m) * m


# ----------------------------------------------------------------------------
# Fused kernel factory: multi-layer LSTM + FC head in one grid step.
# PyTorch gate order [i, f, g, o], packed contiguously over 4*H lanes.
# i/f/o weight & bias columns are pre-scaled by 0.5 (tanh-for-sigmoid fold).
# ----------------------------------------------------------------------------
def _make_fused_kernel(seq_len, b_pad, hidden_dim, gate_w, num_layers):
    H = hidden_dim
    GW = gate_w          # lane width of packed gate slab / hidden-state arrays
    B = b_pad

    def kernel(*refs):
        n_in = 1 + 3 * num_layers + 2
        x_ref = refs[0]                      # (T*B, D_pad)    f32
        w_fc_ref = refs[n_in - 2]            # (GW, 128)       f32
        b_fc_ref = refs[n_in - 1]            # (1, 128)        f32
        o_ref = refs[n_in]                   # (B, 128)        f32
        gates_ref = refs[n_in + 1]           # VMEM (T*B, GW)  f32 scratch
        hseq_ref = refs[n_in + 2]            # VMEM (T*B, GW)  f32 scratch

        h = jnp.zeros((B, GW), jnp.float32)
        for layer in range(num_layers):
            wih_t = refs[1 + 3 * layer][...]   # (D_in_pad, GW) bf16, i/f/o halved
            whh_t = refs[2 + 3 * layer][...]   # (GW, GW)       bf16, i/f/o halved
            bias = refs[3 + 3 * layer][...]    # (1, GW)        f32,  i/f/o halved

            layer_in = x_ref[...] if layer == 0 else hseq_ref[...]
            # Hoisted input projection over the whole sequence: one GEMM with the
            # fused (b_ih + b_hh) bias.  Parked in VMEM so it is NOT live in the
            # vreg file across the unrolled time loop.
            gates_ref[...] = (
                jnp.dot(layer_in.astype(jnp.bfloat16), wih_t,
                        preferred_element_type=jnp.float32)
                + bias
            )

            h = jnp.zeros((B, GW), jnp.float32)
            c = jnp.zeros((B, GW), jnp.float32)
            last_layer = layer == num_layers - 1
            for t in range(seq_len):           # static, fully unrolled (T small)
                g = gates_ref[pl.ds(t * B, B), :] + jnp.dot(
                    h.astype(jnp.bfloat16), whh_t,
                    preferred_element_type=jnp.float32)
                # Single EUP dispatch covering the whole packed [i|f|g|o] slab.
                a = jnp.tanh(g)
                # Realign f/g/o sub-slabs onto c/h's lanes (0..H-1): XLU rolls.
                f_t = pltpu.roll(a, shift=GW - H, axis=1)
                g_t = pltpu.roll(a, shift=GW - 2 * H, axis=1)
                o_t = pltpu.roll(a, shift=GW - 3 * H, axis=1)
                # sigmoid(x) = 0.5*(tanh(x/2)+1); the x/2 was folded into the
                # i/f/o weights/bias, so only cheap VPU fixups remain here.
                c = (0.5 * f_t + 0.5) * c + (0.5 * a + 0.5) * g_t
                h = (0.5 * o_t + 0.5) * jnp.tanh(c)
                if not last_layer:
                    # Keep this layer's hidden sequence in VMEM for the next
                    # layer's hoisted GEMM (no HBM round-trip).
                    hseq_ref[pl.ds(t * B, B), :] = h
            # Lanes >= H of h/c hold bounded garbage; every consumer (W_hh rows,
            # next layer's W_ih rows, W_fc rows) is zero there, so it never
            # reaches a real result.

        # FC head on the last timestep's hidden state; lane-dense 128-wide
        # padded output block (real result lives in column 0).
        o_ref[...] = (
            jnp.dot(h, w_fc_ref[...], preferred_element_type=jnp.float32)
            + b_fc_ref[...]
        )

    return kernel


def _fused_lstm_fc(x2d, flat_params, *, seq_len, b_pad, hidden_dim, gate_w,
                   num_layers):
    kernel = _make_fused_kernel(seq_len, b_pad, hidden_dim, gate_w, num_layers)
    in_arrays = (x2d,) + tuple(flat_params)            # all 2-D, lane-aligned
    in_specs = [pl.BlockSpec(a.shape, lambda i: (0, 0)) for a in in_arrays]
    out_spec = pl.BlockSpec((b_pad, 128), lambda i: (0, 0))
    return pl.pallas_call(
        kernel,
        out_shape=jax.ShapeDtypeStruct((b_pad, 128), jnp.float32),
        grid_spec=pltpu.PrefetchScalarGridSpec(
            num_scalar_prefetch=0,
            grid=(1,),
            in_specs=in_specs,
            out_specs=out_spec,
            scratch_shapes=[
                pltpu.VMEM((seq_len * b_pad, gate_w), jnp.float32),  # gates_ref
                pltpu.VMEM((seq_len * b_pad, gate_w), jnp.float32),  # hseq_ref
            ],
        ),
        compiler_params=pltpu.CompilerParams(
            dimension_semantics=("arbitrary",),
            vmem_limit_bytes=32 * 1024 * 1024,
        ),
    )(*in_arrays)


# ----------------------------------------------------------------------------
# Parameter init: PyTorch-like uniform(-1/sqrt(H), 1/sqrt(H)) at logical sizes,
# packed into the kernel layout: gates contiguous over 4*H lanes, i/f/o columns
# pre-scaled by 0.5 (exact in fp), weights stored bf16, biases f32.
# ----------------------------------------------------------------------------
def init_params(key, input_dim, hidden_dim, num_layers, *, d_pad, gate_w):
    H = hidden_dim
    bound = 1.0 / (H ** 0.5)
    gate_scale = jnp.concatenate([
        jnp.full((H,), 0.5), jnp.full((H,), 0.5),
        jnp.ones((H,)), jnp.full((H,), 0.5)]).astype(jnp.float32)     # [i,f,g,o]
    flat = []
    for layer in range(num_layers):
        d_in = input_dim if layer == 0 else H
        d_in_pad = d_pad if layer == 0 else gate_w
        key, k1, k2, k3, k4 = jax.random.split(key, 5)
        w_ih = jax.random.uniform(k1, (4 * H, d_in), jnp.float32, -bound, bound)
        w_hh = jax.random.uniform(k2, (4 * H, H), jnp.float32, -bound, bound)
        b_ih = jax.random.uniform(k3, (4 * H,), jnp.float32, -bound, bound)
        b_hh = jax.random.uniform(k4, (4 * H,), jnp.float32, -bound, bound)
        b = b_ih + b_hh

        w_ih_t = (w_ih * gate_scale[:, None]).T                       # (d_in, 4H)
        w_hh_t = (w_hh * gate_scale[:, None]).T                       # (H, 4H)
        b_sc = b * gate_scale                                         # (4H,)

        w_ih_t_pad = jnp.zeros((d_in_pad, gate_w), jnp.float32)
        w_ih_t_pad = w_ih_t_pad.at[:d_in, :4 * H].set(w_ih_t)
        w_hh_t_pad = jnp.zeros((gate_w, gate_w), jnp.float32)
        w_hh_t_pad = w_hh_t_pad.at[:H, :4 * H].set(w_hh_t)
        bias_pad = jnp.zeros((1, gate_w), jnp.float32).at[0, :4 * H].set(b_sc)
        flat.extend([w_ih_t_pad.astype(jnp.bfloat16),
                     w_hh_t_pad.astype(jnp.bfloat16),
                     bias_pad])

    key, k5, k6 = jax.random.split(key, 3)
    w_fc = jax.random.uniform(k5, (1, H), jnp.float32, -bound, bound)
    b_fc = jax.random.uniform(k6, (1,), jnp.float32, -bound, bound)
    w_fc_pad = jnp.zeros((gate_w, 128), jnp.float32).at[:H, 0].set(w_fc[0])
    b_fc_pad = jnp.zeros((1, 128), jnp.float32).at[0, 0].set(b_fc[0])
    flat.extend([w_fc_pad, b_fc_pad])
    return tuple(flat)


# ----------------------------------------------------------------------------
# Forward pass equivalent to LSTMRegressor.forward
# ----------------------------------------------------------------------------
@functools.partial(jax.jit, static_argnames=("hidden_dim", "num_layers"))
def lstm_regressor_forward(x, flat_params, hidden_dim, num_layers):
    """x: (batch, seq, input_dim) float32 -> (batch,) float32"""
    B, T, D = x.shape
    b_pad = _round_up(max(B, 8), 8)
    gate_w = _round_up(4 * hidden_dim, 128)
    d_pad = _round_up(max(D, 128), 128)
    # Glue: time-major + pad to lane/sublane-aligned shapes, flatten to 2-D so
    # the hoisted input projection is one GEMM.
    x_tm = jnp.transpose(x, (1, 0, 2)).astype(jnp.float32)            # (T, B, D)
    x_tm = jnp.pad(x_tm, ((0, 0), (0, b_pad - B), (0, d_pad - D)))
    x2d = x_tm.reshape(T * b_pad, d_pad)
    out = _fused_lstm_fc(
        x2d, flat_params, seq_len=T, b_pad=b_pad,
        hidden_dim=hidden_dim, gate_w=gate_w, num_layers=num_layers,
    )                                                                 # (B_pad, 128)
    return out[:B, 0]                                                 # .squeeze(1)


# ----------------------------------------------------------------------------
# Pure-JAX reference: straightforward per-timestep LSTM + FC with standard
# sigmoid/tanh gates.  Uses the SAME bf16-quantized weights (un-doing the 0.5
# i/f/o fold, which is exact for powers of two) and bf16 matmul operands with
# f32 accumulation, so it mirrors the kernel's numeric contract while
# exercising the un-fused reference math.
# ----------------------------------------------------------------------------
def _reference_forward(x, flat_params, hidden_dim, num_layers):
    B, T, _ = x.shape
    H = hidden_dim
    unscale = jnp.concatenate([
        jnp.full((H,), 2.0), jnp.full((H,), 2.0),
        jnp.ones((H,)), jnp.full((H,), 2.0)]).astype(jnp.float32)
    layer_in = x.astype(jnp.float32)                   # (B, T, d_in)
    idx = 0
    for _layer in range(num_layers):
        w_ih_t_pad, w_hh_t_pad, bias_pad = flat_params[idx:idx + 3]
        idx += 3
        d_in = layer_in.shape[-1]
        w_ih = (w_ih_t_pad.astype(jnp.float32)[:d_in, :4 * H]
                * unscale[None, :]).astype(jnp.bfloat16)              # (d_in, 4H)
        w_hh = (w_hh_t_pad.astype(jnp.float32)[:H, :4 * H]
                * unscale[None, :]).astype(jnp.bfloat16)              # (H, 4H)
        b = bias_pad[0, :4 * H] * unscale
        h = jnp.zeros((B, H), jnp.float32)
        c = jnp.zeros((B, H), jnp.float32)
        outs = []
        for t in range(T):
            gates = (
                jnp.dot(layer_in[:, t, :].astype(jnp.bfloat16), w_ih,
                        preferred_element_type=jnp.float32)
                + jnp.dot(h.astype(jnp.bfloat16), w_hh,
                          preferred_element_type=jnp.float32)
                + b)
            i_g = jax.nn.sigmoid(gates[:, 0 * H:1 * H])
            f_g = jax.nn.sigmoid(gates[:, 1 * H:2 * H])
            g_g = jnp.tanh(gates[:, 2 * H:3 * H])
            o_g = jax.nn.sigmoid(gates[:, 3 * H:4 * H])
            c = f_g * c + i_g * g_g
            h = o_g * jnp.tanh(c)
            outs.append(h)
        layer_in = jnp.stack(outs, axis=1)             # (B, T, H)
    w_fc_pad, b_fc_pad = flat_params[idx], flat_params[idx + 1]
    last = layer_in[:, -1, :]
    return (jnp.dot(last, w_fc_pad[:H, 0:1],
                    preferred_element_type=jnp.float32)[:, 0]
            + b_fc_pad[0, 0])


if __name__ == "__main__":
    # Small shapes consistent with the module's forward.
    batch, seq, input_dim, hidden_dim, num_layers = 2, 8, 4, 32, 2

    key = jax.random.PRNGKey(0)
    key, kx = jax.random.split(key)
    x = jax.random.normal(kx, (batch, seq, input_dim), dtype=jnp.float32)

    d_pad = _round_up(max(input_dim, 128), 128)
    gate_w = _round_up(4 * hidden_dim, 128)
    params = init_params(key, input_dim, hidden_dim, num_layers,
                         d_pad=d_pad, gate_w=gate_w)

    out = lstm_regressor_forward(x, params, hidden_dim, num_layers)
    jax.block_until_ready(out)
    assert out.shape == (batch,), out.shape

    ref = _reference_forward(x, params, hidden_dim, num_layers)
    assert jnp.allclose(out, ref, atol=2e-3, rtol=2e-3), (out, ref)

    print("KERNEL_OK")
</pallas_src>

<mosaic_0001>
module attributes {stable_mosaic.version = 11 : i64} {
  func.func @kernel(%arg0: i32, %arg1: memref<64x128xf32, #tpu.memory_space<vmem>>, %arg2: memref<128x128xbf16, #tpu.memory_space<vmem>>, %arg3: memref<128x128xbf16, #tpu.memory_space<vmem>>, %arg4: memref<1x128xf32, #tpu.memory_space<vmem>>, %arg5: memref<128x128xbf16, #tpu.memory_space<vmem>>, %arg6: memref<128x128xbf16, #tpu.memory_space<vmem>>, %arg7: memref<1x128xf32, #tpu.memory_space<vmem>>, %arg8: memref<128x128xf32, #tpu.memory_space<vmem>>, %arg9: memref<1x128xf32, #tpu.memory_space<vmem>>, %arg10: memref<8x128xf32, #tpu.memory_space<vmem>>, %arg11: memref<64x128xf32, #tpu.memory_space<vmem>>, %arg12: memref<64x128xf32, #tpu.memory_space<vmem>>) attributes {dimension_semantics = [#tpu.dimension_semantics<arbitrary>], iteration_bounds = array<i64: 1>, scalar_prefetch = 0 : i64, scratch_operands = 2 : i64, tpu.core_type = #tpu.core_type<tc>, window_params = [{pipeline_mode = #tpu.pipeline_mode<synchronous>, transform_indices = @transform_0, window_bounds = array<i64: 64, 128>}, {pipeline_mode = #tpu.pipeline_mode<synchronous>, transform_indices = @transform_1, window_bounds = array<i64: 128, 128>}, {pipeline_mode = #tpu.pipeline_mode<synchronous>, transform_indices = @transform_2, window_bounds = array<i64: 128, 128>}, {pipeline_mode = #tpu.pipeline_mode<synchronous>, transform_indices = @transform_3, window_bounds = array<i64: 1, 128>}, {pipeline_mode = #tpu.pipeline_mode<synchronous>, transform_indices = @transform_4, window_bounds = array<i64: 128, 128>}, {pipeline_mode = #tpu.pipeline_mode<synchronous>, transform_indices = @transform_5, window_bounds = array<i64: 128, 128>}, {pipeline_mode = #tpu.pipeline_mode<synchronous>, transform_indices = @transform_6, window_bounds = array<i64: 1, 128>}, {pipeline_mode = #tpu.pipeline_mode<synchronous>, transform_indices = @transform_7, window_bounds = array<i64: 128, 128>}, {pipeline_mode = #tpu.pipeline_mode<synchronous>, transform_indices = @transform_8, window_bounds = array<i64: 1, 128>}, {pipeline_mode = #tpu.pipeline_mode<synchronous>, transform_indices = @transform_9, window_bounds = array<i64: 8, 128>}]} {
    %c0 = arith.constant 0 : index
    %c0_0 = arith.constant 0 : index
    %0 = vector.load %arg2[%c0, %c0_0] : memref<128x128xbf16, #tpu.memory_space<vmem>>, vector<128x128xbf16>
    %c0_1 = arith.constant 0 : index
    %c0_2 = arith.constant 0 : index
    %1 = vector.load %arg3[%c0_1, %c0_2] : memref<128x128xbf16, #tpu.memory_space<vmem>>, vector<128x128xbf16>
    %c0_3 = arith.constant 0 : index
    %c0_4 = arith.constant 0 : index
    %2 = vector.load %arg4[%c0_3, %c0_4] : memref<1x128xf32, #tpu.memory_space<vmem>>, vector<1x128xf32>
    %c0_5 = arith.constant 0 : index
    %c0_6 = arith.constant 0 : index
    %3 = vector.load %arg1[%c0_5, %c0_6] : memref<64x128xf32, #tpu.memory_space<vmem>>, vector<64x128xf32>
    %4 = arith.truncf %3 : vector<64x128xf32> to vector<64x128xbf16>
    %cst = arith.constant dense<0.000000e+00> : vector<64x128xf32>
    %5 = tpu.matmul %4, %0, %cst {dimension_numbers = #tpu.dot_dimension_numbers<[1], [0], [0], [1], [0, 0, 1, 1], [], []>} : vector<64x128xbf16>, vector<128x128xbf16>, vector<64x128xf32> -> vector<64x128xf32>
    %6 = vector.broadcast %2 : vector<1x128xf32> to vector<64x128xf32>
    %7 = arith.addf %5, %6 : vector<64x128xf32>
    %c0_7 = arith.constant 0 : index
    %c0_8 = arith.constant 0 : index
    %8 = vector.load %arg11[%c0_7, %c0_8] : memref<64x128xf32, #tpu.memory_space<vmem>>, vector<64x128xf32>
    tpu.vector_store %arg11[%c0_7, %c0_8], %7 {strides = array<i32>} : memref<64x128xf32, #tpu.memory_space<vmem>>, vector<64x128xf32>,
    %cst_9 = arith.constant 0.000000e+00 : f32
    %9 = vector.broadcast %cst_9 : f32 to vector<8x128xf32>
    %cst_10 = arith.constant 0.000000e+00 : f32
    %10 = vector.broadcast %cst_10 : f32 to vector<8x128xf32>
    %c0_11 = arith.constant 0 : index
    %c0_12 = arith.constant 0 : index
    %11 = vector.load %arg11[%c0_11, %c0_12] : memref<64x128xf32, #tpu.memory_space<vmem>>, vector<8x128xf32>
    %12 = arith.truncf %9 : vector<8x128xf32> to vector<8x128xbf16>
    %cst_13 = arith.constant dense<0.000000e+00> : vector<8x128xf32>
    %13 = tpu.matmul %12, %1, %cst_13 {dimension_numbers = #tpu.dot_dimension_numbers<[1], [0], [0], [1], [0, 0, 1, 1], [], []>} : vector<8x128xbf16>, vector<128x128xbf16>, vector<8x128xf32> -> vector<8x128xf32>
    %14 = arith.addf %11, %13 : vector<8x128xf32>
    %15 = math.tanh %14 : vector<8x128xf32>
    %c96_i32 = arith.constant 96 : i32
    %16 = tpu.dynamic_rotate %15 by %c96_i32 dim 1 : vector<8x128xf32>, i32 -> vector<8x128xf32>
    %c64_i32 = arith.constant 64 : i32
    %17 = tpu.dynamic_rotate %15 by %c64_i32 dim 1 : vector<8x128xf32>, i32 -> vector<8x128xf32>
    %c32_i32 = arith.constant 32 : i32
    %18 = tpu.dynamic_rotate %15 by %c32_i32 dim 1 : vector<8x128xf32>, i32 -> vector<8x128xf32>
    %cst_14 = arith.constant 5.000000e-01 : f32
    %19 = vector.broadcast %cst_14 : f32 to vector<8x128xf32>
    %20 = arith.mulf %19, %16 : vector<8x128xf32>
    %cst_15 = arith.constant 5.000000e-01 : f32
    %21 = vector.broadcast %cst_15 : f32 to vector<8x128xf32>
    %22 = arith.addf %20, %21 : vector<8x128xf32>
    %23 = arith.mulf %22, %10 : vector<8x128xf32>
    %cst_16 = arith.constant 5.000000e-01 : f32
    %24 = vector.broadcast %cst_16 : f32 to vector<8x128xf32>
    %25 = arith.mulf %24, %15 : vector<8x128xf32>
    %cst_17 = arith.constant 5.000000e-01 : f32
    %26 = vector.broadcast %cst_17 : f32 to vector<8x128xf32>
    %27 = arith.addf %25, %26 : vector<8x128xf32>
    %28 = arith.mulf %27, %17 : vector<8x128xf32>
    %29 = arith.addf %23, %28 : vector<8x128xf32>
    %cst_18 = arith.constant 5.000000e-01 : f32
    %30 = vector.broadcast %cst_18 : f32 to vector<8x128xf32>
    %31 = arith.mulf %30, %18 : vector<8x128xf32>
    %cst_19 = arith.constant 5.000000e-01 : f32
    %32 = vector.broadcast %cst_19 : f32 to vector<8x128xf32>
    %33 = arith.addf %31, %32 : vector<8x128xf32>
    %34 = math.tanh %29 : vector<8x128xf32>
    %35 = arith.mulf %33, %34 : vector<8x128xf32>
    %c0_20 = arith.constant 0 : index
    %c0_21 = arith.constant 0 : index
    %36 = vector.load %arg12[%c0_20, %c0_21] : memref<64x128xf32, #tpu.memory_space<vmem>>, vector<8x128xf32>
    tpu.vector_store %arg12[%c0_20, %c0_21], %35 {strides = array<i32>} : memref<64x128xf32, #tpu.memory_space<vmem>>, vector<8x128xf32>,
    %c8 = arith.constant 8 : index
    %c0_22 = arith.constant 0 : index
    %37 = vector.load %arg11[%c8, %c0_22] : memref<64x128xf32, #tpu.memory_space<vmem>>, vector<8x128xf32>
    %38 = arith.truncf %35 : vector<8x128xf32> to vector<8x128xbf16>
    %cst_23 = arith.constant dense<0.000000e+00> : vector<8x128xf32>
    %39 = tpu.matmul %38, %1, %cst_23 {dimension_numbers = #tpu.dot_dimension_numbers<[1], [0], [0], [1], [0, 0, 1, 1], [], []>} : vector<8x128xbf16>, vector<128x128xbf16>, vector<8x128xf32> -> vector<8x128xf32>
    %40 = arith.addf %37, %39 : vector<8x128xf32>
    %41 = math.tanh %40 : vector<8x128xf32>
    %c96_i32_24 = arith.constant 96 : i32
    %42 = tpu.dynamic_rotate %41 by %c96_i32_24 dim 1 : vector<8x128xf32>, i32 -> vector<8x128xf32>
    %c64_i32_25 = arith.constant 64 : i32
    %43 = tpu.dynamic_rotate %41 by %c64_i32_25 dim 1 : vector<8x128xf32>, i32 -> vector<8x128xf32>
    %c32_i32_26 = arith.constant 32 : i32
    %44 = tpu.dynamic_rotate %41 by %c32_i32_26 dim 1 : vector<8x128xf32>, i32 -> vector<8x128xf32>
    %cst_27 = arith.constant 5.000000e-01 : f32
    %45 = vector.broadcast %cst_27 : f32 to vector<8x128xf32>
    %46 = arith.mulf %45, %42 : vector<8x128xf32>
    %cst_28 = arith.constant 5.000000e-01 : f32
    %47 = vector.broadcast %cst_28 : f32 to vector<8x128xf32>
    %48 = arith.addf %46, %47 : vector<8x128xf32>
    %49 = arith.mulf %48, %29 : vector<8x128xf32>
    %cst_29 = arith.constant 5.000000e-01 : f32
    %50 = vector.broadcast %cst_29 : f32 to vector<8x128xf32>
    %51 = arith.mulf %50, %41 : vector<8x128xf32>
    %cst_30 = arith.constant 5.000000e-01 : f32
    %52 = vector.broadcast %cst_30 : f32 to vector<8x128xf32>
    %53 = arith.addf %51, %52 : vector<8x128xf32>
    %54 = arith.mulf %53, %43 : vector<8x128xf32>
    %55 = arith.addf %49, %54 : vector<8x128xf32>
    %cst_31 = arith.constant 5.000000e-01 : f32
    %56 = vector.broadcast %cst_31 : f32 to vector<8x128xf32>
    %57 = arith.mulf %56, %44 : vector<8x128xf32>
    %cst_32 = arith.constant 5.000000e-01 : f32
    %58 = vector.broadcast %cst_32 : f32 to vector<8x128xf32>
    %59 = arith.addf %57, %58 : vector<8x128xf32>
    %60 = math.tanh %55 : vector<8x128xf32>
    %61 = arith.mulf %59, %60 : vector<8x128xf32>
    %c8_33 = arith.constant 8 : index
    %c0_34 = arith.constant 0 : index
    %62 = vector.load %arg12[%c8_33, %c0_34] : memref<64x128xf32, #tpu.memory_space<vmem>>, vector<8x128xf32>
    tpu.vector_store %arg12[%c8_33, %c0_34], %61 {strides = array<i32>} : memref<64x128xf32, #tpu.memory_space<vmem>>, vector<8x128xf32>,
    %c16 = arith.constant 16 : index
    %c0_35 = arith.constant 0 : index
    %63 = vector.load %arg11[%c16, %c0_35] : memref<64x128xf32, #tpu.memory_space<vmem>>, vector<8x128xf32>
    %64 = arith.truncf %61 : vector<8x128xf32> to vector<8x128xbf16>
    %cst_36 = arith.constant dense<0.000000e+00> : vector<8x128xf32>
    %65 = tpu.matmul %64, %1, %cst_36 {dimension_numbers = #tpu.dot_dimension_numbers<[1], [0], [0], [1], [0, 0, 1, 1], [], []>} : vector<8x128xbf16>, vector<128x128xbf16>, vector<8x128xf32> -> vector<8x128xf32>
    %66 = arith.addf %63, %65 : vector<8x128xf32>
    %67 = math.tanh %66 : vector<8x128xf32>
    %c96_i32_37 = arith.constant 96 : i32
    %68 = tpu.dynamic_rotate %67 by %c96_i32_37 dim 1 : vector<8x128xf32>, i32 -> vector<8x128xf32>
    %c64_i32_38 = arith.constant 64 : i32
    %69 = tpu.dynamic_rotate %67 by %c64_i32_38 dim 1 : vector<8x128xf32>, i32 -> vector<8x128xf32>
    %c32_i32_39 = arith.constant 32 : i32
    %70 = tpu.dynamic_rotate %67 by %c32_i32_39 dim 1 : vector<8x128xf32>, i32 -> vector<8x128xf32>
    %cst_40 = arith.constant 5.000000e-01 : f32
    %71 = vector.broadcast %cst_40 : f32 to vector<8x128xf32>
    %72 = arith.mulf %71, %68 : vector<8x128xf32>
    %cst_41 = arith.constant 5.000000e-01 : f32
    %73 = vector.broadcast %cst_41 : f32 to vector<8x128xf32>
    %74 = arith.addf %72, %73 : vector<8x128xf32>
    %75 = arith.mulf %74, %55 : vector<8x128xf32>
    %cst_42 = arith.constant 5.000000e-01 : f32
    %76 = vector.broadcast %cst_42 : f32 to vector<8x128xf32>
    %77 = arith.mulf %76, %67 : vector<8x128xf32>
    %cst_43 = arith.constant 5.000000e-01 : f32
    %78 = vector.broadcast %cst_43 : f32 to vector<8x128xf32>
    %79 = arith.addf %77, %78 : vector<8x128xf32>
    %80 = arith.mulf %79, %69 : vector<8x128xf32>
    %81 = arith.addf %75, %80 : vector<8x128xf32>
    %cst_44 = arith.constant 5.000000e-01 : f32
    %82 = vector.broadcast %cst_44 : f32 to vector<8x128xf32>
    %83 = arith.mulf %82, %70 : vector<8x128xf32>
    %cst_45 = arith.constant 5.000000e-01 : f32
    %84 = vector.broadcast %cst_45 : f32 to vector<8x128xf32>
    %85 = arith.addf %83, %84 : vector<8x128xf32>
    %86 = math.tanh %81 : vector<8x128xf32>
    %87 = arith.mulf %85, %86 : vector<8x128xf32>
    %c16_46 = arith.constant 16 : index
    %c0_47 = arith.constant 0 : index
    %88 = vector.load %arg12[%c16_46, %c0_47] : memref<64x128xf32, #tpu.memory_space<vmem>>, vector<8x128xf32>
    tpu.vector_store %arg12[%c16_46, %c0_47], %87 {strides = array<i32>} : memref<64x128xf32, #tpu.memory_space<vmem>>, vector<8x128xf32>,
    %c24 = arith.constant 24 : index
    %c0_48 = arith.constant 0 : index
    %89 = vector.load %arg11[%c24, %c0_48] : memref<64x128xf32, #tpu.memory_space<vmem>>, vector<8x128xf32>
    %90 = arith.truncf %87 : vector<8x128xf32> to vector<8x128xbf16>
    %cst_49 = arith.constant dense<0.000000e+00> : vector<8x128xf32>
    %91 = tpu.matmul %90, %1, %cst_49 {dimension_numbers = #tpu.dot_dimension_numbers<[1], [0], [0], [1], [0, 0, 1, 1], [], []>} : vector<8x128xbf16>, vector<128x128xbf16>, vector<8x128xf32> -> vector<8x128xf32>
    %92 = arith.addf %89, %91 : vector<8x128xf32>
    %93 = math.tanh %92 : vector<8x128xf32>
    %c96_i32_50 = arith.constant 96 : i32
    %94 = tpu.dynamic_rotate %93 by %c96_i32_50 dim 1 : vector<8x128xf32>, i32 -> vector<8x128xf32>
    %c64_i32_51 = arith.constant 64 : i32
    %95 = tpu.dynamic_rotate %93 by %c64_i32_51 dim 1 : vector<8x128xf32>, i32 -> vector<8x128xf32>
    %c32_i32_52 = arith.constant 32 : i32
    %96 = tpu.dynamic_rotate %93 by %c32_i32_52 dim 1 : vector<8x128xf32>, i32 -> vector<8x128xf32>
    %cst_53 = arith.constant 5.000000e-01 : f32
    %97 = vector.broadcast %cst_53 : f32 to vector<8x128xf32>
    %98 = arith.mulf %97, %94 : vector<8x128xf32>
    %cst_54 = arith.constant 5.000000e-01 : f32
    %99 = vector.broadcast %cst_54 : f32 to vector<8x128xf32>
    %100 = arith.addf %98, %99 : vector<8x128xf32>
    %101 = arith.mulf %100, %81 : vector<8x128xf32>
    %cst_55 = arith.constant 5.000000e-01 : f32
    %102 = vector.broadcast %cst_55 : f32 to vector<8x128xf32>
    %103 = arith.mulf %102, %93 : vector<8x128xf32>
    %cst_56 = arith.constant 5.000000e-01 : f32
    %104 = vector.broadcast %cst_56 : f32 to vector<8x128xf32>
    %105 = arith.addf %103, %104 : vector<8x128xf32>
    %106 = arith.mulf %105, %95 : vector<8x128xf32>
    %107 = arith.addf %101, %106 : vector<8x128xf32>
    %cst_57 = arith.constant 5.000000e-01 : f32
    %108 = vector.broadcast %cst_57 : f32 to vector<8x128xf32>
    %109 = arith.mulf %108, %96 : vector<8x128xf32>
    %cst_58 = arith.constant 5.000000e-01 : f32
    %110 = vector.broadcast %cst_58 : f32 to vector<8x128xf32>
    %111 = arith.addf %109, %110 : vector<8x128xf32>
    %112 = math.tanh %107 : vector<8x128xf32>
    %113 = arith.mulf %111, %112 : vector<8x128xf32>
    %c24_59 = arith.constant 24 : index
    %c0_60 = arith.constant 0 : index
    %114 = vector.load %arg12[%c24_59, %c0_60] : memref<64x128xf32, #tpu.memory_space<vmem>>, vector<8x128xf32>
    tpu.vector_store %arg12[%c24_59, %c0_60], %113 {strides = array<i32>} : memref<64x128xf32, #tpu.memory_space<vmem>>, vector<8x128xf32>,
    %c32 = arith.constant 32 : index
    %c0_61 = arith.constant 0 : index
    %115 = vector.load %arg11[%c32, %c0_61] : memref<64x128xf32, #tpu.memory_space<vmem>>, vector<8x128xf32>
    %116 = arith.truncf %113 : vector<8x128xf32> to vector<8x128xbf16>
    %cst_62 = arith.constant dense<0.000000e+00> : vector<8x128xf32>
    %117 = tpu.matmul %116, %1, %cst_62 {dimension_numbers = #tpu.dot_dimension_numbers<[1], [0], [0], [1], [0, 0, 1, 1], [], []>} : vector<8x128xbf16>, vector<128x128xbf16>, vector<8x128xf32> -> vector<8x128xf32>
    %118 = arith.addf %115, %117 : vector<8x128xf32>
    %119 = math.tanh %118 : vector<8x128xf32>
    %c96_i32_63 = arith.constant 96 : i32
    %120 = tpu.dynamic_rotate %119 by %c96_i32_63 dim 1 : vector<8x128xf32>, i32 -> vector<8x128xf32>
    %c64_i32_64 = arith.constant 64 : i32
    %121 = tpu.dynamic_rotate %119 by %c64_i32_64 dim 1 : vector<8x128xf32>, i32 -> vector<8x128xf32>
    %c32_i32_65 = arith.constant 32 : i32
    %122 = tpu.dynamic_rotate %119 by %c32_i32_65 dim 1 : vector<8x128xf32>, i32 -> vector<8x128xf32>
    %cst_66 = arith.constant 5.000000e-01 : f32
    %123 = vector.broadcast %cst_66 : f32 to vector<8x128xf32>
    %124 = arith.mulf %123, %120 : vector<8x128xf32>
    %cst_67 = arith.constant 5.000000e-01 : f32
    %125 = vector.broadcast %cst_67 : f32 to vector<8x128xf32>
    %126 = arith.addf %124, %125 : vector<8x128xf32>
    %127 = arith.mulf %126, %107 : vector<8x128xf32>
    %cst_68 = arith.constant 5.000000e-01 : f32
    %128 = vector.broadcast %cst_68 : f32 to vector<8x128xf32>
    %129 = arith.mulf %128, %119 : vector<8x128xf32>
    %cst_69 = arith.constant 5.000000e-01 : f32
    %130 = vector.broadcast %cst_69 : f32 to vector<8x128xf32>
    %131 = arith.addf %129, %130 : vector<8x128xf32>
    %132 = arith.mulf %131, %121 : vector<8x128xf32>
    %133 = arith.addf %127, %132 : vector<8x128xf32>
    %cst_70 = arith.constant 5.000000e-01 : f32
    %134 = vector.broadcast %cst_70 : f32 to vector<8x128xf32>
    %135 = arith.mulf %134, %122 : vector<8x128xf32>
    %cst_71 = arith.constant 5.000000e-01 : f32
    %136 = vector.broadcast %cst_71 : f32 to vector<8x128xf32>
    %137 = arith.addf %135, %136 : vector<8x128xf32>
    %138 = math.tanh %133 : vector<8x128xf32>
    %139 = arith.mulf %137, %138 : vector<8x128xf32>
    %c32_72 = arith.constant 32 : index
    %c0_73 = arith.constant 0 : index
    %140 = vector.load %arg12[%c32_72, %c0_73] : memref<64x128xf32, #tpu.memory_space<vmem>>, vector<8x128xf32>
    tpu.vector_store %arg12[%c32_72, %c0_73], %139 {strides = array<i32>} : memref<64x128xf32, #tpu.memory_space<vmem>>, vector<8x128xf32>,
    %c40 = arith.constant 40 : index
    %c0_74 = arith.constant 0 : index
    %141 = vector.load %arg11[%c40, %c0_74] : memref<64x128xf32, #tpu.memory_space<vmem>>, vector<8x128xf32>
    %142 = arith.truncf %139 : vector<8x128xf32> to vector<8x128xbf16>
    %cst_75 = arith.constant dense<0.000000e+00> : vector<8x128xf32>
    %143 = tpu.matmul %142, %1, %cst_75 {dimension_numbers = #tpu.dot_dimension_numbers<[1], [0], [0], [1], [0, 0, 1, 1], [], []>} : vector<8x128xbf16>, vector<128x128xbf16>, vector<8x128xf32> -> vector<8x128xf32>
    %144 = arith.addf %141, %143 : vector<8x128xf32>
    %145 = math.tanh %144 : vector<8x128xf32>
    %c96_i32_76 = arith.constant 96 : i32
    %146 = tpu.dynamic_rotate %145 by %c96_i32_76 dim 1 : vector<8x128xf32>, i32 -> vector<8x128xf32>
    %c64_i32_77 = arith.constant 64 : i32
    %147 = tpu.dynamic_rotate %145 by %c64_i32_77 dim 1 : vector<8x128xf32>, i32 -> vector<8x128xf32>
    %c32_i32_78 = arith.constant 32 : i32
    %148 = tpu.dynamic_rotate %145 by %c32_i32_78 dim 1 : vector<8x128xf32>, i32 -> vector<8x128xf32>
    %cst_79 = arith.constant 5.000000e-01 : f32
    %149 = vector.broadcast %cst_79 : f32 to vector<8x128xf32>
    %150 = arith.mulf %149, %146 : vector<8x128xf32>
    %cst_80 = arith.constant 5.000000e-01 : f32
    %151 = vector.broadcast %cst_80 : f32 to vector<8x128xf32>
    %152 = arith.addf %150, %151 : vector<8x128xf32>
    %153 = arith.mulf %152, %133 : vector<8x128xf32>
    %cst_81 = arith.constant 5.000000e-01 : f32
    %154 = vector.broadcast %cst_81 : f32 to vector<8x128xf32>
    %155 = arith.mulf %154, %145 : vector<8x128xf32>
    %cst_82 = arith.constant 5.000000e-01 : f32
    %156 = vector.broadcast %cst_82 : f32 to vector<8x128xf32>
    %157 = arith.addf %155, %156 : vector<8x128xf32>
    %158 = arith.mulf %157, %147 : vector<8x128xf32>
    %159 = arith.addf %153, %158 : vector<8x128xf32>
    %cst_83 = arith.constant 5.000000e-01 : f32
    %160 = vector.broadcast %cst_83 : f32 to vector<8x128xf32>
    %161 = arith.mulf %160, %148 : vector<8x128xf32>
    %cst_84 = arith.constant 5.000000e-01 : f32
    %162 = vector.broadcast %cst_84 : f32 to vector<8x128xf32>
    %163 = arith.addf %161, %162 : vector<8x128xf32>
    %164 = math.tanh %159 : vector<8x128xf32>
    %165 = arith.mulf %163, %164 : vector<8x128xf32>
    %c40_85 = arith.constant 40 : index
    %c0_86 = arith.constant 0 : index
    %166 = vector.load %arg12[%c40_85, %c0_86] : memref<64x128xf32, #tpu.memory_space<vmem>>, vector<8x128xf32>
    tpu.vector_store %arg12[%c40_85, %c0_86], %165 {strides = array<i32>} : memref<64x128xf32, #tpu.memory_space<vmem>>, vector<8x128xf32>,
    %c48 = arith.constant 48 : index
    %c0_87 = arith.constant 0 : index
    %167 = vector.load %arg11[%c48, %c0_87] : memref<64x128xf32, #tpu.memory_space<vmem>>, vector<8x128xf32>
    %168 = arith.truncf %165 : vector<8x128xf32> to vector<8x128xbf16>
    %cst_88 = arith.constant dense<0.000000e+00> : vector<8x128xf32>
    %169 = tpu.matmul %168, %1, %cst_88 {dimension_numbers = #tpu.dot_dimension_numbers<[1], [0], [0], [1], [0, 0, 1, 1], [], []>} : vector<8x128xbf16>, vector<128x128xbf16>, vector<8x128xf32> -> vector<8x128xf32>
    %170 = arith.addf %167, %169 : vector<8x128xf32>
    %171 = math.tanh %170 : vector<8x128xf32>
    %c96_i32_89 = arith.constant 96 : i32
    %172 = tpu.dynamic_rotate %171 by %c96_i32_89 dim 1 : vector<8x128xf32>, i32 -> vector<8x128xf32>
    %c64_i32_90 = arith.constant 64 : i32
    %173 = tpu.dynamic_rotate %171 by %c64_i32_90 dim 1 : vector<8x128xf32>, i32 -> vector<8x128xf32>
    %c32_i32_91 = arith.constant 32 : i32
    %174 = tpu.dynamic_rotate %171 by %c32_i32_91 dim 1 : vector<8x128xf32>, i32 -> vector<8x128xf32>
    %cst_92 = arith.constant 5.000000e-01 : f32
    %175 = vector.broadcast %cst_92 : f32 to vector<8x128xf32>
    %176 = arith.mulf %175, %172 : vector<8x128xf32>
    %cst_93 = arith.constant 5.000000e-01 : f32
    %177 = vector.broadcast %cst_93 : f32 to vector<8x128xf32>
    %178 = arith.addf %176, %177 : vector<8x128xf32>
    %179 = arith.mulf %178, %159 : vector<8x128xf32>
    %cst_94 = arith.constant 5.000000e-01 : f32
    %180 = vector.broadcast %cst_94 : f32 to vector<8x128xf32>
    %181 = arith.mulf %180, %171 : vector<8x128xf32>
    %cst_95 = arith.constant 5.000000e-01 : f32
    %182 = vector.broadcast %cst_95 : f32 to vector<8x128xf32>
    %183 = arith.addf %181, %182 : vector<8x128xf32>
    %184 = arith.mulf %183, %173 : vector<8x128xf32>
    %185 = arith.addf %179, %184 : vector<8x128xf32>
    %cst_96 = arith.constant 5.000000e-01 : f32
    %186 = vector.broadcast %cst_96 : f32 to vector<8x128xf32>
    %187 = arith.mulf %186, %174 : vector<8x128xf32>
    %cst_97 = arith.constant 5.000000e-01 : f32
    %188 = vector.broadcast %cst_97 : f32 to vector<8x128xf32>
    %189 = arith.addf %187, %188 : vector<8x128xf32>
    %190 = math.tanh %185 : vector<8x128xf32>
    %191 = arith.mulf %189, %190 : vector<8x128xf32>
    %c48_98 = arith.constant 48 : index
    %c0_99 = arith.constant 0 : index
    %192 = vector.load %arg12[%c48_98, %c0_99] : memref<64x128xf32, #tpu.memory_space<vmem>>, vector<8x128xf32>
    tpu.vector_store %arg12[%c48_98, %c0_99], %191 {strides = array<i32>} : memref<64x128xf32, #tpu.memory_space<vmem>>, vector<8x128xf32>,
    %c56 = arith.constant 56 : index
    %c0_100 = arith.constant 0 : index
    %193 = vector.load %arg11[%c56, %c0_100] : memref<64x128xf32, #tpu.memory_space<vmem>>, vector<8x128xf32>
    %194 = arith.truncf %191 : vector<8x128xf32> to vector<8x128xbf16>
    %cst_101 = arith.constant dense<0.000000e+00> : vector<8x128xf32>
    %195 = tpu.matmul %194, %1, %cst_101 {dimension_numbers = #tpu.dot_dimension_numbers<[1], [0], [0], [1], [0, 0, 1, 1], [], []>} : vector<8x128xbf16>, vector<128x128xbf16>, vector<8x128xf32> -> vector<8x128xf32>
    %196 = arith.addf %193, %195 : vector<8x128xf32>
    %197 = math.tanh %196 : vector<8x128xf32>
    %c96_i32_102 = arith.constant 96 : i32
    %198 = tpu.dynamic_rotate %197 by %c96_i32_102 dim 1 : vector<8x128xf32>, i32 -> vector<8x128xf32>
    %c64_i32_103 = arith.constant 64 : i32
    %199 = tpu.dynamic_rotate %197 by %c64_i32_103 dim 1 : vector<8x128xf32>, i32 -> vector<8x128xf32>
    %c32_i32_104 = arith.constant 32 : i32
    %200 = tpu.dynamic_rotate %197 by %c32_i32_104 dim 1 : vector<8x128xf32>, i32 -> vector<8x128xf32>
    %cst_105 = arith.constant 5.000000e-01 : f32
    %201 = vector.broadcast %cst_105 : f32 to vector<8x128xf32>
    %202 = arith.mulf %201, %198 : vector<8x128xf32>
    %cst_106 = arith.constant 5.000000e-01 : f32
    %203 = vector.broadcast %cst_106 : f32 to vector<8x128xf32>
    %204 = arith.addf %202, %203 : vector<8x128xf32>
    %205 = arith.mulf %204, %185 : vector<8x128xf32>
    %cst_107 = arith.constant 5.000000e-01 : f32
    %206 = vector.broadcast %cst_107 : f32 to vector<8x128xf32>
    %207 = arith.mulf %206, %197 : vector<8x128xf32>
    %cst_108 = arith.constant 5.000000e-01 : f32
    %208 = vector.broadcast %cst_108 : f32 to vector<8x128xf32>
    %209 = arith.addf %207, %208 : vector<8x128xf32>
    %210 = arith.mulf %209, %199 : vector<8x128xf32>
    %211 = arith.addf %205, %210 : vector<8x128xf32>
    %cst_109 = arith.constant 5.000000e-01 : f32
    %212 = vector.broadcast %cst_109 : f32 to vector<8x128xf32>
    %213 = arith.mulf %212, %200 : vector<8x128xf32>
    %cst_110 = arith.constant 5.000000e-01 : f32
    %214 = vector.broadcast %cst_110 : f32 to vector<8x128xf32>
    %215 = arith.addf %213, %214 : vector<8x128xf32>
    %216 = math.tanh %211 : vector<8x128xf32>
    %217 = arith.mulf %215, %216 : vector<8x128xf32>
    %c56_111 = arith.constant 56 : index
    %c0_112 = arith.constant 0 : index
    %218 = vector.load %arg12[%c56_111, %c0_112] : memref<64x128xf32, #tpu.memory_space<vmem>>, vector<8x128xf32>
    tpu.vector_store %arg12[%c56_111, %c0_112], %217 {strides = array<i32>} : memref<64x128xf32, #tpu.memory_space<vmem>>, vector<8x128xf32>,
    %c0_113 = arith.constant 0 : index
    %c0_114 = arith.constant 0 : index
    %219 = vector.load %arg5[%c0_113, %c0_114] : memref<128x128xbf16, #tpu.memory_space<vmem>>, vector<128x128xbf16>
    %c0_115 = arith.constant 0 : index
    %c0_116 = arith.constant 0 : index
    %220 = vector.load %arg6[%c0_115, %c0_116] : memref<128x128xbf16, #tpu.memory_space<vmem>>, vector<128x128xbf16>
    %c0_117 = arith.constant 0 : index
    %c0_118 = arith.constant 0 : index
    %221 = vector.load %arg7[%c0_117, %c0_118] : memref<1x128xf32, #tpu.memory_space<vmem>>, vector<1x128xf32>
    %c0_119 = arith.constant 0 : index
    %c0_120 = arith.constant 0 : index
    %222 = vector.load %arg12[%c0_119, %c0_120] : memref<64x128xf32, #tpu.memory_space<vmem>>, vector<64x128xf32>
    %223 = arith.truncf %222 : vector<64x128xf32> to vector<64x128xbf16>
    %cst_121 = arith.constant dense<0.000000e+00> : vector<64x128xf32>
    %224 = tpu.matmul %223, %219, %cst_121 {dimension_numbers = #tpu.dot_dimension_numbers<[1], [0], [0], [1], [0, 0, 1, 1], [], []>} : vector<64x128xbf16>, vector<128x128xbf16>, vector<64x128xf32> -> vector<64x128xf32>
    %225 = vector.broadcast %221 : vector<1x128xf32> to vector<64x128xf32>
    %226 = arith.addf %224, %225 : vector<64x128xf32>
    %c0_122 = arith.constant 0 : index
    %c0_123 = arith.constant 0 : index
    %227 = vector.load %arg11[%c0_122, %c0_123] : memref<64x128xf32, #tpu.memory_space<vmem>>, vector<64x128xf32>
    tpu.vector_store %arg11[%c0_122, %c0_123], %226 {strides = array<i32>} : memref<64x128xf32, #tpu.memory_space<vmem>>, vector<64x128xf32>,
    %cst_124 = arith.constant 0.000000e+00 : f32
    %228 = vector.broadcast %cst_124 : f32 to vector<8x128xf32>
    %cst_125 = arith.constant 0.000000e+00 : f32
    %229 = vector.broadcast %cst_125 : f32 to vector<8x128xf32>
    %c0_126 = arith.constant 0 : index
    %c0_127 = arith.constant 0 : index
    %230 = vector.load %arg11[%c0_126, %c0_127] : memref<64x128xf32, #tpu.memory_space<vmem>>, vector<8x128xf32>
    %231 = arith.truncf %228 : vector<8x128xf32> to vector<8x128xbf16>
    %cst_128 = arith.constant dense<0.000000e+00> : vector<8x128xf32>
    %232 = tpu.matmul %231, %220, %cst_128 {dimension_numbers = #tpu.dot_dimension_numbers<[1], [0], [0], [1], [0, 0, 1, 1], [], []>} : vector<8x128xbf16>, vector<128x128xbf16>, vector<8x128xf32> -> vector<8x128xf32>
    %233 = arith.addf %230, %232 : vector<8x128xf32>
    %234 = math.tanh %233 : vector<8x128xf32>
    %c96_i32_129 = arith.constant 96 : i32
    %235 = tpu.dynamic_rotate %234 by %c96_i32_129 dim 1 : vector<8x128xf32>, i32 -> vector<8x128xf32>
    %c64_i32_130 = arith.constant 64 : i32
    %236 = tpu.dynamic_rotate %234 by %c64_i32_130 dim 1 : vector<8x128xf32>, i32 -> vector<8x128xf32>
    %c32_i32_131 = arith.constant 32 : i32
    %237 = tpu.dynamic_rotate %234 by %c32_i32_131 dim 1 : vector<8x128xf32>, i32 -> vector<8x128xf32>
    %cst_132 = arith.constant 5.000000e-01 : f32
    %238 = vector.broadcast %cst_132 : f32 to vector<8x128xf32>
    %239 = arith.mulf %238, %235 : vector<8x128xf32>
    %cst_133 = arith.constant 5.000000e-01 : f32
    %240 = vector.broadcast %cst_133 : f32 to vector<8x128xf32>
    %241 = arith.addf %239, %240 : vector<8x128xf32>
    %242 = arith.mulf %241, %229 : vector<8x128xf32>
    %cst_134 = arith.constant 5.000000e-01 : f32
    %243 = vector.broadcast %cst_134 : f32 to vector<8x128xf32>
    %244 = arith.mulf %243, %234 : vector<8x128xf32>
    %cst_135 = arith.constant 5.000000e-01 : f32
    %245 = vector.broadcast %cst_135 : f32 to vector<8x128xf32>
    %246 = arith.addf %244, %245 : vector<8x128xf32>
    %247 = arith.mulf %246, %236 : vector<8x128xf32>
    %248 = arith.addf %242, %247 : vector<8x128xf32>
    %cst_136 = arith.constant 5.000000e-01 : f32
    %249 = vector.broadcast %cst_136 : f32 to vector<8x128xf32>
    %250 = arith.mulf %249, %237 : vector<8x128xf32>
    %cst_137 = arith.constant 5.000000e-01 : f32
    %251 = vector.broadcast %cst_137 : f32 to vector<8x128xf32>
    %252 = arith.addf %250, %251 : vector<8x128xf32>
    %253 = math.tanh %248 : vector<8x128xf32>
    %254 = arith.mulf %252, %253 : vector<8x128xf32>
    %c8_138 = arith.constant 8 : index
    %c0_139 = arith.constant 0 : index
    %255 = vector.load %arg11[%c8_138, %c0_139] : memref<64x128xf32, #tpu.memory_space<vmem>>, vector<8x128xf32>
    %256 = arith.truncf %254 : vector<8x128xf32> to vector<8x128xbf16>
    %cst_140 = arith.constant dense<0.000000e+00> : vector<8x128xf32>
    %257 = tpu.matmul %256, %220, %cst_140 {dimension_numbers = #tpu.dot_dimension_numbers<[1], [0], [0], [1], [0, 0, 1, 1], [], []>} : vector<8x128xbf16>, vector<128x128xbf16>, vector<8x128xf32> -> vector<8x128xf32>
    %258 = arith.addf %255, %257 : vector<8x128xf32>
    %259 = math.tanh %258 : vector<8x128xf32>
    %c96_i32_141 = arith.constant 96 : i32
    %260 = tpu.dynamic_rotate %259 by %c96_i32_141 dim 1 : vector<8x128xf32>, i32 -> vector<8x128xf32>
    %c64_i32_142 = arith.constant 64 : i32
    %261 = tpu.dynamic_rotate %259 by %c64_i32_142 dim 1 : vector<8x128xf32>, i32 -> vector<8x128xf32>
    %c32_i32_143 = arith.constant 32 : i32
    %262 = tpu.dynamic_rotate %259 by %c32_i32_143 dim 1 : vector<8x128xf32>, i32 -> vector<8x128xf32>
    %cst_144 = arith.constant 5.000000e-01 : f32
    %263 = vector.broadcast %cst_144 : f32 to vector<8x128xf32>
    %264 = arith.mulf %263, %260 : vector<8x128xf32>
    %cst_145 = arith.constant 5.000000e-01 : f32
    %265 = vector.broadcast %cst_145 : f32 to vector<8x128xf32>
    %266 = arith.addf %264, %265 : vector<8x128xf32>
    %267 = arith.mulf %266, %248 : vector<8x128xf32>
    %cst_146 = arith.constant 5.000000e-01 : f32
    %268 = vector.broadcast %cst_146 : f32 to vector<8x128xf32>
    %269 = arith.mulf %268, %259 : vector<8x128xf32>
    %cst_147 = arith.constant 5.000000e-01 : f32
    %270 = vector.broadcast %cst_147 : f32 to vector<8x128xf32>
    %271 = arith.addf %269, %270 : vector<8x128xf32>
    %272 = arith.mulf %271, %261 : vector<8x128xf32>
    %273 = arith.addf %267, %272 : vector<8x128xf32>
    %cst_148 = arith.constant 5.000000e-01 : f32
    %274 = vector.broadcast %cst_148 : f32 to vector<8x128xf32>
    %275 = arith.mulf %274, %262 : vector<8x128xf32>
    %cst_149 = arith.constant 5.000000e-01 : f32
    %276 = vector.broadcast %cst_149 : f32 to vector<8x128xf32>
    %277 = arith.addf %275, %276 : vector<8x128xf32>
    %278 = math.tanh %273 : vector<8x128xf32>
    %279 = arith.mulf %277, %278 : vector<8x128xf32>
    %c16_150 = arith.constant 16 : index
    %c0_151 = arith.constant 0 : index
    %280 = vector.load %arg11[%c16_150, %c0_151] : memref<64x128xf32, #tpu.memory_space<vmem>>, vector<8x128xf32>
    %281 = arith.truncf %279 : vector<8x128xf32> to vector<8x128xbf16>
    %cst_152 = arith.constant dense<0.000000e+00> : vector<8x128xf32>
    %282 = tpu.matmul %281, %220, %cst_152 {dimension_numbers = #tpu.dot_dimension_numbers<[1], [0], [0], [1], [0, 0, 1, 1], [], []>} : vector<8x128xbf16>, vector<128x128xbf16>, vector<8x128xf32> -> vector<8x128xf32>
    %283 = arith.addf %280, %282 : vector<8x128xf32>
    %284 = math.tanh %283 : vector<8x128xf32>
    %c96_i32_153 = arith.constant 96 : i32
    %285 = tpu.dynamic_rotate %284 by %c96_i32_153 dim 1 : vector<8x128xf32>, i32 -> vector<8x128xf32>
    %c64_i32_154 = arith.constant 64 : i32
    %286 = tpu.dynamic_rotate %284 by %c64_i32_154 dim 1 : vector<8x128xf32>, i32 -> vector<8x128xf32>
    %c32_i32_155 = arith.constant 32 : i32
    %287 = tpu.dynamic_rotate %284 by %c32_i32_155 dim 1 : vector<8x128xf32>, i32 -> vector<8x128xf32>
    %cst_156 = arith.constant 5.000000e-01 : f32
    %288 = vector.broadcast %cst_156 : f32 to vector<8x128xf32>
    %289 = arith.mulf %288, %285 : vector<8x128xf32>
    %cst_157 = arith.constant 5.000000e-01 : f32
    %290 = vector.broadcast %cst_157 : f32 to vector<8x128xf32>
    %291 = arith.addf %289, %290 : vector<8x128xf32>
    %292 = arith.mulf %291, %273 : vector<8x128xf32>
    %cst_158 = arith.constant 5.000000e-01 : f32
    %293 = vector.broadcast %cst_158 : f32 to vector<8x128xf32>
    %294 = arith.mulf %293, %284 : vector<8x128xf32>
    %cst_159 = arith.constant 5.000000e-01 : f32
    %295 = vector.broadcast %cst_159 : f32 to vector<8x128xf32>
    %296 = arith.addf %294, %295 : vector<8x128xf32>
    %297 = arith.mulf %296, %286 : vector<8x128xf32>
    %298 = arith.addf %292, %297 : vector<8x128xf32>
    %cst_160 = arith.constant 5.000000e-01 : f32
    %299 = vector.broadcast %cst_160 : f32 to vector<8x128xf32>
    %300 = arith.mulf %299, %287 : vector<8x128xf32>
    %cst_161 = arith.constant 5.000000e-01 : f32
    %301 = vector.broadcast %cst_161 : f32 to vector<8x128xf32>
    %302 = arith.addf %300, %301 : vector<8x128xf32>
    %303 = math.tanh %298 : vector<8x128xf32>
    %304 = arith.mulf %302, %303 : vector<8x128xf32>
    %c24_162 = arith.constant 24 : index
    %c0_163 = arith.constant 0 : index
    %305 = vector.load %arg11[%c24_162, %c0_163] : memref<64x128xf32, #tpu.memory_space<vmem>>, vector<8x128xf32>
    %306 = arith.truncf %304 : vector<8x128xf32> to vector<8x128xbf16>
    %cst_164 = arith.constant dense<0.000000e+00> : vector<8x128xf32>
    %307 = tpu.matmul %306, %220, %cst_164 {dimension_numbers = #tpu.dot_dimension_numbers<[1], [0], [0], [1], [0, 0, 1, 1], [], []>} : vector<8x128xbf16>, vector<128x128xbf16>, vector<8x128xf32> -> vector<8x128xf32>
    %308 = arith.addf %305, %307 : vector<8x128xf32>
    %309 = math.tanh %308 : vector<8x128xf32>
    %c96_i32_165 = arith.constant 96 : i32
    %310 = tpu.dynamic_rotate %309 by %c96_i32_165 dim 1 : vector<8x128xf32>, i32 -> vector<8x128xf32>
    %c64_i32_166 = arith.constant 64 : i32
    %311 = tpu.dynamic_rotate %309 by %c64_i32_166 dim 1 : vector<8x128xf32>, i32 -> vector<8x128xf32>
    %c32_i32_167 = arith.constant 32 : i32
    %312 = tpu.dynamic_rotate %309 by %c32_i32_167 dim 1 : vector<8x128xf32>, i32 -> vector<8x128xf32>
    %cst_168 = arith.constant 5.000000e-01 : f32
    %313 = vector.broadcast %cst_168 : f32 to vector<8x128xf32>
    %314 = arith.mulf %313, %310 : vector<8x128xf32>
    %cst_169 = arith.constant 5.000000e-01 : f32
    %315 = vector.broadcast %cst_169 : f32 to vector<8x128xf32>
    %316 = arith.addf %314, %315 : vector<8x128xf32>
    %317 = arith.mulf %316, %298 : vector<8x128xf32>
    %cst_170 = arith.constant 5.000000e-01 : f32
    %318 = vector.broadcast %cst_170 : f32 to vector<8x128xf32>
    %319 = arith.mulf %318, %309 : vector<8x128xf32>
    %cst_171 = arith.constant 5.000000e-01 : f32
    %320 = vector.broadcast %cst_171 : f32 to vector<8x128xf32>
    %321 = arith.addf %319, %320 : vector<8x128xf32>
    %322 = arith.mulf %321, %311 : vector<8x128xf32>
    %323 = arith.addf %317, %322 : vector<8x128xf32>
    %cst_172 = arith.constant 5.000000e-01 : f32
    %324 = vector.broadcast %cst_172 : f32 to vector<8x128xf32>
    %325 = arith.mulf %324, %312 : vector<8x128xf32>
    %cst_173 = arith.constant 5.000000e-01 : f32
    %326 = vector.broadcast %cst_173 : f32 to vector<8x128xf32>
    %327 = arith.addf %325, %326 : vector<8x128xf32>
    %328 = math.tanh %323 : vector<8x128xf32>
    %329 = arith.mulf %327, %328 : vector<8x128xf32>
    %c32_174 = arith.constant 32 : index
    %c0_175 = arith.constant 0 : index
    %330 = vector.load %arg11[%c32_174, %c0_175] : memref<64x128xf32, #tpu.memory_space<vmem>>, vector<8x128xf32>
    %331 = arith.truncf %329 : vector<8x128xf32> to vector<8x128xbf16>
    %cst_176 = arith.constant dense<0.000000e+00> : vector<8x128xf32>
    %332 = tpu.matmul %331, %220, %cst_176 {dimension_numbers = #tpu.dot_dimension_numbers<[1], [0], [0], [1], [0, 0, 1, 1], [], []>} : vector<8x128xbf16>, vector<128x128xbf16>, vector<8x128xf32> -> vector<8x128xf32>
    %333 = arith.addf %330, %332 : vector<8x128xf32>
    %334 = math.tanh %333 : vector<8x128xf32>
    %c96_i32_177 = arith.constant 96 : i32
    %335 = tpu.dynamic_rotate %334 by %c96_i32_177 dim 1 : vector<8x128xf32>, i32 -> vector<8x128xf32>
    %c64_i32_178 = arith.constant 64 : i32
    %336 = tpu.dynamic_rotate %334 by %c64_i32_178 dim 1 : vector<8x128xf32>, i32 -> vector<8x128xf32>
    %c32_i32_179 = arith.constant 32 : i32
    %337 = tpu.dynamic_rotate %334 by %c32_i32_179 dim 1 : vector<8x128xf32>, i32 -> vector<8x128xf32>
    %cst_180 = arith.constant 5.000000e-01 : f32
    %338 = vector.broadcast %cst_180 : f32 to vector<8x128xf32>
    %339 = arith.mulf %338, %335 : vector<8x128xf32>
    %cst_181 = arith.constant 5.000000e-01 : f32
    %340 = vector.broadcast %cst_181 : f32 to vector<8x128xf32>
    %341 = arith.addf %339, %340 : vector<8x128xf32>
    %342 = arith.mulf %341, %323 : vector<8x128xf32>
    %cst_182 = arith.constant 5.000000e-01 : f32
    %343 = vector.broadcast %cst_182 : f32 to vector<8x128xf32>
    %344 = arith.mulf %343, %334 : vector<8x128xf32>
    %cst_183 = arith.constant 5.000000e-01 : f32
    %345 = vector.broadcast %cst_183 : f32 to vector<8x128xf32>
    %346 = arith.addf %344, %345 : vector<8x128xf32>
    %347 = arith.mulf %346, %336 : vector<8x128xf32>
    %348 = arith.addf %342, %347 : vector<8x128xf32>
    %cst_184 = arith.constant 5.000000e-01 : f32
    %349 = vector.broadcast %cst_184 : f32 to vector<8x128xf32>
    %350 = arith.mulf %349, %337 : vector<8x128xf32>
    %cst_185 = arith.constant 5.000000e-01 : f32
    %351 = vector.broadcast %cst_185 : f32 to vector<8x128xf32>
    %352 = arith.addf %350, %351 : vector<8x128xf32>
    %353 = math.tanh %348 : vector<8x128xf32>
    %354 = arith.mulf %352, %353 : vector<8x128xf32>
    %c40_186 = arith.constant 40 : index
    %c0_187 = arith.constant 0 : index
    %355 = vector.load %arg11[%c40_186, %c0_187] : memref<64x128xf32, #tpu.memory_space<vmem>>, vector<8x128xf32>
    %356 = arith.truncf %354 : vector<8x128xf32> to vector<8x128xbf16>
    %cst_188 = arith.constant dense<0.000000e+00> : vector<8x128xf32>
    %357 = tpu.matmul %356, %220, %cst_188 {dimension_numbers = #tpu.dot_dimension_numbers<[1], [0], [0], [1], [0, 0, 1, 1], [], []>} : vector<8x128xbf16>, vector<128x128xbf16>, vector<8x128xf32> -> vector<8x128xf32>
    %358 = arith.addf %355, %357 : vector<8x128xf32>
    %359 = math.tanh %358 : vector<8x128xf32>
    %c96_i32_189 = arith.constant 96 : i32
    %360 = tpu.dynamic_rotate %359 by %c96_i32_189 dim 1 : vector<8x128xf32>, i32 -> vector<8x128xf32>
    %c64_i32_190 = arith.constant 64 : i32
    %361 = tpu.dynamic_rotate %359 by %c64_i32_190 dim 1 : vector<8x128xf32>, i32 -> vector<8x128xf32>
    %c32_i32_191 = arith.constant 32 : i32
    %362 = tpu.dynamic_rotate %359 by %c32_i32_191 dim 1 : vector<8x128xf32>, i32 -> vector<8x128xf32>
    %cst_192 = arith.constant 5.000000e-01 : f32
    %363 = vector.broadcast %cst_192 : f32 to vector<8x128xf32>
    %364 = arith.mulf %363, %360 : vector<8x128xf32>
    %cst_193 = arith.constant 5.000000e-01 : f32
    %365 = vector.broadcast %cst_193 : f32 to vector<8x128xf32>
    %366 = arith.addf %364, %365 : vector<8x128xf32>
    %367 = arith.mulf %366, %348 : vector<8x128xf32>
    %cst_194 = arith.constant 5.000000e-01 : f32
    %368 = vector.broadcast %cst_194 : f32 to vector<8x128xf32>
    %369 = arith.mulf %368, %359 : vector<8x128xf32>
    %cst_195 = arith.constant 5.000000e-01 : f32
    %370 = vector.broadcast %cst_195 : f32 to vector<8x128xf32>
    %371 = arith.addf %369, %370 : vector<8x128xf32>
    %372 = arith.mulf %371, %361 : vector<8x128xf32>
    %373 = arith.addf %367, %372 : vector<8x128xf32>
    %cst_196 = arith.constant 5.000000e-01 : f32
    %374 = vector.broadcast %cst_196 : f32 to vector<8x128xf32>
    %375 = arith.mulf %374, %362 : vector<8x128xf32>
    %cst_197 = arith.constant 5.000000e-01 : f32
    %376 = vector.broadcast %cst_197 : f32 to vector<8x128xf32>
    %377 = arith.addf %375, %376 : vector<8x128xf32>
    %378 = math.tanh %373 : vector<8x128xf32>
    %379 = arith.mulf %377, %378 : vector<8x128xf32>
    %c48_198 = arith.constant 48 : index
    %c0_199 = arith.constant 0 : index
    %380 = vector.load %arg11[%c48_198, %c0_199] : memref<64x128xf32, #tpu.memory_space<vmem>>, vector<8x128xf32>
    %381 = arith.truncf %379 : vector<8x128xf32> to vector<8x128xbf16>
    %cst_200 = arith.constant dense<0.000000e+00> : vector<8x128xf32>
    %382 = tpu.matmul %381, %220, %cst_200 {dimension_numbers = #tpu.dot_dimension_numbers<[1], [0], [0], [1], [0, 0, 1, 1], [], []>} : vector<8x128xbf16>, vector<128x128xbf16>, vector<8x128xf32> -> vector<8x128xf32>
    %383 = arith.addf %380, %382 : vector<8x128xf32>
    %384 = math.tanh %383 : vector<8x128xf32>
    %c96_i32_201 = arith.constant 96 : i32
    %385 = tpu.dynamic_rotate %384 by %c96_i32_201 dim 1 : vector<8x128xf32>, i32 -> vector<8x128xf32>
    %c64_i32_202 = arith.constant 64 : i32
    %386 = tpu.dynamic_rotate %384 by %c64_i32_202 dim 1 : vector<8x128xf32>, i32 -> vector<8x128xf32>
    %c32_i32_203 = arith.constant 32 : i32
    %387 = tpu.dynamic_rotate %384 by %c32_i32_203 dim 1 : vector<8x128xf32>, i32 -> vector<8x128xf32>
    %cst_204 = arith.constant 5.000000e-01 : f32
    %388 = vector.broadcast %cst_204 : f32 to vector<8x128xf32>
    %389 = arith.mulf %388, %385 : vector<8x128xf32>
    %cst_205 = arith.constant 5.000000e-01 : f32
    %390 = vector.broadcast %cst_205 : f32 to vector<8x128xf32>
    %391 = arith.addf %389, %390 : vector<8x128xf32>
    %392 = arith.mulf %391, %373 : vector<8x128xf32>
    %cst_206 = arith.constant 5.000000e-01 : f32
    %393 = vector.broadcast %cst_206 : f32 to vector<8x128xf32>
    %394 = arith.mulf %393, %384 : vector<8x128xf32>
    %cst_207 = arith.constant 5.000000e-01 : f32
    %395 = vector.broadcast %cst_207 : f32 to vector<8x128xf32>
    %396 = arith.addf %394, %395 : vector<8x128xf32>
    %397 = arith.mulf %396, %386 : vector<8x128xf32>
    %398 = arith.addf %392, %397 : vector<8x128xf32>
    %cst_208 = arith.constant 5.000000e-01 : f32
    %399 = vector.broadcast %cst_208 : f32 to vector<8x128xf32>
    %400 = arith.mulf %399, %387 : vector<8x128xf32>
    %cst_209 = arith.constant 5.000000e-01 : f32
    %401 = vector.broadcast %cst_209 : f32 to vector<8x128xf32>
    %402 = arith.addf %400, %401 : vector<8x128xf32>
    %403 = math.tanh %398 : vector<8x128xf32>
    %404 = arith.mulf %402, %403 : vector<8x128xf32>
    %c56_210 = arith.constant 56 : index
    %c0_211 = arith.constant 0 : index
    %405 = vector.load %arg11[%c56_210, %c0_211] : memref<64x128xf32, #tpu.memory_space<vmem>>, vector<8x128xf32>
    %406 = arith.truncf %404 : vector<8x128xf32> to vector<8x128xbf16>
    %cst_212 = arith.constant dense<0.000000e+00> : vector<8x128xf32>
    %407 = tpu.matmul %406, %220, %cst_212 {dimension_numbers = #tpu.dot_dimension_numbers<[1], [0], [0], [1], [0, 0, 1, 1], [], []>} : vector<8x128xbf16>, vector<128x128xbf16>, vector<8x128xf32> -> vector<8x128xf32>
    %408 = arith.addf %405, %407 : vector<8x128xf32>
    %409 = math.tanh %408 : vector<8x128xf32>
    %c96_i32_213 = arith.constant 96 : i32
    %410 = tpu.dynamic_rotate %409 by %c96_i32_213 dim 1 : vector<8x128xf32>, i32 -> vector<8x128xf32>
    %c64_i32_214 = arith.constant 64 : i32
    %411 = tpu.dynamic_rotate %409 by %c64_i32_214 dim 1 : vector<8x128xf32>, i32 -> vector<8x128xf32>
    %c32_i32_215 = arith.constant 32 : i32
    %412 = tpu.dynamic_rotate %409 by %c32_i32_215 dim 1 : vector<8x128xf32>, i32 -> vector<8x128xf32>
    %cst_216 = arith.constant 5.000000e-01 : f32
    %413 = vector.broadcast %cst_216 : f32 to vector<8x128xf32>
    %414 = arith.mulf %413, %410 : vector<8x128xf32>
    %cst_217 = arith.constant 5.000000e-01 : f32
    %415 = vector.broadcast %cst_217 : f32 to vector<8x128xf32>
    %416 = arith.addf %414, %415 : vector<8x128xf32>
    %417 = arith.mulf %416, %398 : vector<8x128xf32>
    %cst_218 = arith.constant 5.000000e-01 : f32
    %418 = vector.broadcast %cst_218 : f32 to vector<8x128xf32>
    %419 = arith.mulf %418, %409 : vector<8x128xf32>
    %cst_219 = arith.constant 5.000000e-01 : f32
    %420 = vector.broadcast %cst_219 : f32 to vector<8x128xf32>
    %421 = arith.addf %419, %420 : vector<8x128xf32>
    %422 = arith.mulf %421, %411 : vector<8x128xf32>
    %423 = arith.addf %417, %422 : vector<8x128xf32>
    %cst_220 = arith.constant 5.000000e-01 : f32
    %424 = vector.broadcast %cst_220 : f32 to vector<8x128xf32>
    %425 = arith.mulf %424, %412 : vector<8x128xf32>
    %cst_221 = arith.constant 5.000000e-01 : f32
    %426 = vector.broadcast %cst_221 : f32 to vector<8x128xf32>
    %427 = arith.addf %425, %426 : vector<8x128xf32>
    %428 = math.tanh %423 : vector<8x128xf32>
    %429 = arith.mulf %427, %428 : vector<8x128xf32>
    %c0_222 = arith.constant 0 : index
    %c0_223 = arith.constant 0 : index
    %430 = vector.load %arg8[%c0_222, %c0_223] : memref<128x128xf32, #tpu.memory_space<vmem>>, vector<128x128xf32>
    %cst_224 = arith.constant dense<0.000000e+00> : vector<8x128xf32>
    %431 = tpu.matmul %429, %430, %cst_224 {dimension_numbers = #tpu.dot_dimension_numbers<[1], [0], [0], [1], [0, 0, 1, 1], [], []>} : vector<8x128xf32>, vector<128x128xf32>, vector<8x128xf32> -> vector<8x128xf32>
    %c0_225 = arith.constant 0 : index
    %c0_226 = arith.constant 0 : index
    %432 = vector.load %arg9[%c0_225, %c0_226] : memref<1x128xf32, #tpu.memory_space<vmem>>, vector<1x128xf32>
    %433 = vector.broadcast %432 : vector<1x128xf32> to vector<8x128xf32>
    %434 = arith.addf %431, %433 : vector<8x128xf32>
    %c0_227 = arith.constant 0 : index
    %c0_228 = arith.constant 0 : index
    %435 = vector.load %arg10[%c0_227, %c0_228] : memref<8x128xf32, #tpu.memory_space<vmem>>, vector<8x128xf32>
    tpu.vector_store %arg10[%c0_227, %c0_228], %434 {strides = array<i32>} : memref<8x128xf32, #tpu.memory_space<vmem>>, vector<8x128xf32>,
    return
  }
  func.func @transform_0(%arg0: i32) -> (i32, i32) {
    %c0_i32 = arith.constant 0 : i32
    %c0_i32_0 = arith.constant 0 : i32
    %c0_i32_1 = arith.constant 0 : i32
    return %c0_i32, %c0_i32_0 : i32, i32
  }
  func.func @transform_1(%arg0: i32) -> (i32, i32) {
    %c0_i32 = arith.constant 0 : i32
    %c0_i32_0 = arith.constant 0 : i32
    %c0_i32_1 = arith.constant 0 : i32
    return %c0_i32, %c0_i32_0 : i32, i32
  }
  func.func @transform_2(%arg0: i32) -> (i32, i32) {
    %c0_i32 = arith.constant 0 : i32
    %c0_i32_0 = arith.constant 0 : i32
    %c0_i32_1 = arith.constant 0 : i32
    return %c0_i32, %c0_i32_0 : i32, i32
  }
  func.func @transform_3(%arg0: i32) -> (i32, i32) {
    %c0_i32 = arith.constant 0 : i32
    %c0_i32_0 = arith.constant 0 : i32
    %c0_i32_1 = arith.constant 0 : i32
    return %c0_i32, %c0_i32_0 : i32, i32
  }
  func.func @transform_4(%arg0: i32) -> (i32, i32) {
    %c0_i32 = arith.constant 0 : i32
    %c0_i32_0 = arith.constant 0 : i32
    %c0_i32_1 = arith.constant 0 : i32
    return %c0_i32, %c0_i32_0 : i32, i32
  }
  func.func @transform_5(%arg0: i32) -> (i32, i32) {
    %c0_i32 = arith.constant 0 : i32
    %c0_i32_0 = arith.constant 0 : i32
    %c0_i32_1 = arith.constant 0 : i32
    return %c0_i32, %c0_i32_0 : i32, i32
  }
  func.func @transform_6(%arg0: i32) -> (i32, i32) {
    %c0_i32 = arith.constant 0 : i32
    %c0_i32_0 = arith.constant 0 : i32
    %c0_i32_1 = arith.constant 0 : i32
    return %c0_i32, %c0_i32_0 : i32, i32
  }
  func.func @transform_7(%arg0: i32) -> (i32, i32) {
    %c0_i32 = arith.constant 0 : i32
    %c0_i32_0 = arith.constant 0 : i32
    %c0_i32_1 = arith.constant 0 : i32
    return %c0_i32, %c0_i32_0 : i32, i32
  }
  func.func @transform_8(%arg0: i32) -> (i32, i32) {
    %c0_i32 = arith.constant 0 : i32
    %c0_i32_0 = arith.constant 0 : i32
    %c0_i32_1 = arith.constant 0 : i32
    return %c0_i32, %c0_i32_0 : i32, i32
  }
  func.func @transform_9(%arg0: i32) -> (i32, i32) {
    %c0_i32 = arith.constant 0 : i32
    %c0_i32_0 = arith.constant 0 : i32
    %c0_i32_1 = arith.constant 0 : i32
    return %c0_i32, %c0_i32_0 : i32, i32
  }
}

</mosaic_0001>

<llo_original>
// kernel: lstm_regressor_forward.1
$region0: #{lstm_regressor_forward.1}
  #allocation0 [shape = 'u32[]', space=smem, size = 0x4, offset = 0x4, fixed_abs, tag = 'smem constant byte address 0x4 - core index']
  #allocation1 [shape = 'u32[72,128]{1,0:T(1,128)}', space=vmem, size = 0x9000, scoped, tag = 'internal scratch']
  #allocation2 [shape = 'f32[64,128]{1,0:T(8,128)}', space=vmem, size = 0x8000, scoped, tag = 'scratch operand']
  #allocation3 [shape = 'f32[64,128]{1,0:T(8,128)}', space=vmem, size = 0x8000, scoped, tag = 'scratch operand']
  %s0 = inlined_call_operand.vmem [shape: f32[64,128], index: 0, kind: input, shape index: {}]
  %s1 = inlined_call_operand.vmem [shape: bf16[128,128], index: 1, kind: input, shape index: {}]
  %s2 = inlined_call_operand.hbm [shape: bf16[128,128], index: 2, kind: input, shape index: {}]
  %s3 = inlined_call_operand.vmem [shape: f32[1,128], index: 3, kind: input, shape index: {}]
  %s4 = inlined_call_operand.hbm [shape: bf16[128,128], index: 4, kind: input, shape index: {}]
  %s5 = inlined_call_operand.hbm [shape: bf16[128,128], index: 5, kind: input, shape index: {}]
  %s6 = inlined_call_operand.vmem [shape: f32[1,128], index: 6, kind: input, shape index: {}]
  %s7 = inlined_call_operand.hbm [shape: f32[128,128], index: 7, kind: input, shape index: {}]
  %s8 = inlined_call_operand.vmem [shape: f32[1,128], index: 8, kind: input, shape index: {}]
  %s9 = inlined_call_operand.vmem [shape: f32[8,128], index: 9, kind: output, shape index: {}]
  %s10 = sld [smem:[#allocation0]]
  $region62: #{lstm_regressor_forward.1} parent=0
    _
  %s12 = ssub.s32 1, %s10
  %s13 = scalar_select 0, %s12, %s10
  $region1: #{lstm_regressor_forward.1} parent=0
    #allocation4 [shape = 'u8[32768]{0}', space=vmem, size = 0x8000, scoped, tag = 'input window, operand 2, single buffered']
    #allocation5 [shape = 's32[1]{0}', space=sflag, size = 0x4, scoped, tag = 'scoped memory for lstm_regressor_forward.1']
    #allocation6 [shape = 'u8[32768]{0}', space=vmem, size = 0x8000, scoped, tag = 'input window, operand 4, single buffered']
    #allocation7 [shape = 's32[1]{0}', space=sflag, size = 0x4, scoped, tag = 'scoped memory for lstm_regressor_forward.1']
    #allocation8 [shape = 'u8[32768]{0}', space=vmem, size = 0x8000, scoped, tag = 'input window, operand 5, single buffered']
    #allocation9 [shape = 'u8[65536]{0}', space=vmem, size = 0x10000, scoped, tag = 'input window, operand 7, single buffered']
    #allocation10 [shape = 's32[1]{0}', space=sflag, size = 0x4, scoped, tag = 'scoped memory for lstm_regressor_forward.1']
    %14 = vsyncpa [#allocation5], 0
    %15 = vsyncpa [#allocation7], 0
    %16 = vsyncpa [#allocation10], 0
    // Predicated region
    $region2: #{lstm_regressor_forward.1} parent=1 // pred_check
      _
    $region3: #{lstm_regressor_forward.1} parent=1 // pred_check_branch
      %18 = sbr.rel (0) target = $region5
    $region4: #{lstm_regressor_forward.1} parent=1 // pred_region
      _
    $region5: #{lstm_regressor_forward.1} parent=1 // pred_fallthru
      _
    // Predicated region
    $region6: #{lstm_regressor_forward.1} parent=1 // pred_check
      _
    $region7: #{lstm_regressor_forward.1} parent=1 // pred_check_branch
      %20 = sbr.rel (0) target = $region9
    $region8: #{lstm_regressor_forward.1} parent=1 // pred_region
      _
    $region9: #{lstm_regressor_forward.1} parent=1 // pred_fallthru
      _
    // Predicated region
    $region10: #{lstm_regressor_forward.1} parent=1 // pred_check
      _
    $region11: #{lstm_regressor_forward.1} parent=1 // pred_check_branch
      %22 = sbr.rel (0) target = $region13
    $region12: #{lstm_regressor_forward.1} parent=1 // pred_region
      %24 = vsyncadd [#allocation5], 0
      %s25 = sshll.u32 %s2, 4
      %s26 = int_to_ptr.hbm [resolvable:$true] %s25
      %s27 = sshll.u32 [#allocation4], 4
      %s28 = int_to_ptr.vmem [resolvable:$true] %s27
      %33 = dma.hbm_to_vmem [thread:$0]  %s26, 1024, %s28, [#allocation5], 64, 64, 4
    $region13: #{lstm_regressor_forward.1} parent=1 // pred_fallthru
      _
    // Predicated region
    $region14: #{lstm_regressor_forward.1} parent=1 // pred_check
      _
    $region15: #{lstm_regressor_forward.1} parent=1 // pred_check_branch
      %35 = sbr.rel (0) target = $region17
    $region16: #{lstm_regressor_forward.1} parent=1 // pred_region
      _
    $region17: #{lstm_regressor_forward.1} parent=1 // pred_fallthru
      _
    // Predicated region
    $region18: #{lstm_regressor_forward.1} parent=1 // pred_check
      _
    $region19: #{lstm_regressor_forward.1} parent=1 // pred_check_branch
      %37 = sbr.rel (0) target = $region21
    $region20: #{lstm_regressor_forward.1} parent=1 // pred_region
      %39 = vsyncadd [#allocation7], 0
      %s40 = sshll.u32 %s4, 4
      %s41 = int_to_ptr.hbm [resolvable:$true] %s40
      %s42 = sshll.u32 [#allocation6], 4
      %s43 = int_to_ptr.vmem [resolvable:$true] %s42
      %48 = dma.hbm_to_vmem [thread:$0]  %s41, 1024, %s43, [#allocation7], 64, 64, 4
    $region21: #{lstm_regressor_forward.1} parent=1 // pred_fallthru
      _
    // Predicated region
    $region22: #{lstm_regressor_forward.1} parent=1 // pred_check
      _
    $region23: #{lstm_regressor_forward.1} parent=1 // pred_check_branch
      %50 = sbr.rel (0) target = $region25
    $region24: #{lstm_regressor_forward.1} parent=1 // pred_region
      %52 = vsyncadd [#allocation7], 0
      %s53 = sshll.u32 %s5, 4
      %s54 = int_to_ptr.hbm [resolvable:$true] %s53
      %s55 = sshll.u32 [#allocation8], 4
      %s56 = int_to_ptr.vmem [resolvable:$true] %s55
      %61 = dma.hbm_to_vmem [thread:$0]  %s54, 1024, %s56, [#allocation7], 64, 64, 4
    $region25: #{lstm_regressor_forward.1} parent=1 // pred_fallthru
      _
    // Predicated region
    $region26: #{lstm_regressor_forward.1} parent=1 // pred_check
      _
    $region27: #{lstm_regressor_forward.1} parent=1 // pred_check_branch
      %63 = sbr.rel (0) target = $region29
    $region28: #{lstm_regressor_forward.1} parent=1 // pred_region
      _
    $region29: #{lstm_regressor_forward.1} parent=1 // pred_fallthru
      _
    // Predicated region
    $region30: #{lstm_regressor_forward.1} parent=1 // pred_check
      _
    $region31: #{lstm_regressor_forward.1} parent=1 // pred_check_branch
      %65 = sbr.rel (0) target = $region33
    $region32: #{lstm_regressor_forward.1} parent=1 // pred_region
      %67 = vsyncadd [#allocation10], 0
      %s68 = sshll.u32 %s7, 4
      %s69 = int_to_ptr.hbm [resolvable:$true] %s68
      %s70 = sshll.u32 [#allocation9], 4
      %s71 = int_to_ptr.vmem [resolvable:$true] %s70
      %76 = dma.hbm_to_vmem [thread:$0]  %s69, 2048, %s71, [#allocation10], 128, 128, 8
    $region33: #{lstm_regressor_forward.1} parent=1 // pred_fallthru
      _
    // Predicated region
    $region34: #{lstm_regressor_forward.1} parent=1 // pred_check
      _
    $region35: #{lstm_regressor_forward.1} parent=1 // pred_check_branch
      %78 = sbr.rel (0) target = $region37
    $region36: #{lstm_regressor_forward.1} parent=1 // pred_region
      _
    $region37: #{lstm_regressor_forward.1} parent=1 // pred_fallthru
      _
    // Predicated region
    $region38: #{lstm_regressor_forward.1} parent=1 // pred_check
      _
    $region39: #{lstm_regressor_forward.1} parent=1 // pred_check_branch
      %80 = sbr.rel (0) target = $region41
    $region40: #{lstm_regressor_forward.1} parent=1 // pred_region
      %82 = dma.done [#allocation5], 1024
    $region41: #{lstm_regressor_forward.1} parent=1 // pred_fallthru
      _
    // Predicated region
    $region42: #{lstm_regressor_forward.1} parent=1 // pred_check
      _
    $region43: #{lstm_regressor_forward.1} parent=1 // pred_check_branch
      %84 = sbr.rel (0) target = $region45
    $region44: #{lstm_regressor_forward.1} parent=1 // pred_region
      %86 = dma.done [#allocation7], 1024
    $region45: #{lstm_regressor_forward.1} parent=1 // pred_fallthru
      _
    // Predicated region
    $region46: #{lstm_regressor_forward.1} parent=1 // pred_check
      _
    $region47: #{lstm_regressor_forward.1} parent=1 // pred_check_branch
      %88 = sbr.rel (0) target = $region49
    $region48: #{lstm_regressor_forward.1} parent=1 // pred_region
      %90 = dma.done [#allocation7], 1024
    $region49: #{lstm_regressor_forward.1} parent=1 // pred_fallthru
      _
    // Predicated region
    $region50: #{lstm_regressor_forward.1} parent=1 // pred_check
      _
    $region51: #{lstm_regressor_forward.1} parent=1 // pred_check_branch
      %92 = sbr.rel (0) target = $region53
    $region52: #{lstm_regressor_forward.1} parent=1 // pred_region
      %94 = dma.done [#allocation10], 2048
    $region53: #{lstm_regressor_forward.1} parent=1 // pred_fallthru
      _
    %v96 = vld [vmem:[%s1] sm:$0xf]
    %v97 = vld [vmem:[%s1 + $0x4] sm:$0xf]
    %v98 = vld [vmem:[%s1 + $0x8] sm:$0xf]
    %v99 = vld [vmem:[%s1 + $0xc] sm:$0xf]
    %v100 = vld [vmem:[%s1 + $0x10] sm:$0xf]
    %v101 = vld [vmem:[%s1 + $0x14] sm:$0xf]
    %v102 = vld [vmem:[%s1 + $0x18] sm:$0xf]
    %v103 = vld [vmem:[%s1 + $0x1c] sm:$0xf]
    %v104 = vld [vmem:[%s1 + $0x20] sm:$0xf]
    %v105 = vld [vmem:[%s1 + $0x24] sm:$0xf]
    %v106 = vld [vmem:[%s1 + $0x28] sm:$0xf]
    %v107 = vld [vmem:[%s1 + $0x2c] sm:$0xf]
    %v108 = vld [vmem:[%s1 + $0x30] sm:$0xf]
    %v109 = vld [vmem:[%s1 + $0x34] sm:$0xf]
    %v110 = vld [vmem:[%s1 + $0x38] sm:$0xf]
    %v111 = vld [vmem:[%s1 + $0x3c] sm:$0xf]
    %v112 = vld [vmem:[#allocation4] sm:$0xf]
    %v113 = vld [vmem:[#allocation4 + $0x4] sm:$0xf]
    %v114 = vld [vmem:[#allocation4 + $0x8] sm:$0xf]
    %v115 = vld [vmem:[#allocation4 + $0xc] sm:$0xf]
    %v116 = vld [vmem:[#allocation4 + $0x10] sm:$0xf]
    %v117 = vld [vmem:[#allocation4 + $0x14] sm:$0xf]
    %v118 = vld [vmem:[#allocation4 + $0x18] sm:$0xf]
    %v119 = vld [vmem:[#allocation4 + $0x1c] sm:$0xf]
    %v120 = vld [vmem:[#allocation4 + $0x20] sm:$0xf]
    %v121 = vld [vmem:[#allocation4 + $0x24] sm:$0xf]
    %v122 = vld [vmem:[#allocation4 + $0x28] sm:$0xf]
    %v123 = vld [vmem:[#allocation4 + $0x2c] sm:$0xf]
    %v124 = vld [vmem:[#allocation4 + $0x30] sm:$0xf]
    %v125 = vld [vmem:[#allocation4 + $0x34] sm:$0xf]
    %v126 = vld [vmem:[#allocation4 + $0x38] sm:$0xf]
    %v127 = vld [vmem:[#allocation4 + $0x3c] sm:$0xf]
    %v128 = vld [vmem:[%s3] sm:$0x1]
    %v129 = vld [vmem:[%s0] sm:$0xff]
    %v130 = vld [vmem:[%s0 + $0x8] sm:$0xff]
    %v131 = vld [vmem:[%s0 + $0x10] sm:$0xff]
    %v132 = vld [vmem:[%s0 + $0x18] sm:$0xff]
    %v133 = vld [vmem:[%s0 + $0x20] sm:$0xff]
    %v134 = vld [vmem:[%s0 + $0x28] sm:$0xff]
    %v135 = vld [vmem:[%s0 + $0x30] sm:$0xff]
    %v136 = vld [vmem:[%s0 + $0x38] sm:$0xff]
    %v137 = vpack.c.bf16 %v130, %v129
    %v138 = vpack.c.bf16 %v132, %v131
    %v139 = vpack.c.bf16 %v134, %v133
    %v140 = vpack.c.bf16 %v136, %v135
    %v142 = vperm.slane %v128, 0
    %v160 = vunpack.c.l.b16 %v96
    %v161 = vunpack.c.l.b16 %v97
    %v162 = vunpack.c.l.b16 %v98
    %v163 = vunpack.c.l.b16 %v99
    %v164 = vunpack.c.l.b16 %v100
    %v165 = vunpack.c.l.b16 %v101
    %v166 = vunpack.c.l.b16 %v102
    %v167 = vunpack.c.l.b16 %v103
    %v168 = vunpack.c.l.b16 %v104
    %v169 = vunpack.c.l.b16 %v105
    %v170 = vunpack.c.l.b16 %v106
    %v171 = vunpack.c.l.b16 %v107
    %v172 = vunpack.c.l.b16 %v108
    %v173 = vunpack.c.l.b16 %v109
    %v174 = vunpack.c.l.b16 %v110
    %v175 = vunpack.c.l.b16 %v111
    %v176 = vpack.c.b16 %v161, %v160
    %v177 = vpack.c.b16 %v163, %v162
    %v178 = vpack.c.b16 %v165, %v164
    %v179 = vpack.c.b16 %v167, %v166
    %v180 = vpack.c.b16 %v169, %v168
    %v181 = vpack.c.b16 %v171, %v170
    %v182 = vpack.c.b16 %v173, %v172
    %v183 = vpack.c.b16 %v175, %v174
    %192 = vmatpush.bf16.msra.mxu0 %v183
    %193 = vmatpush.bf16.msra.mxu0 %v182
    %194 = vmatpush.bf16.msra.mxu0 %v181
    %195 = vmatpush.bf16.msra.mxu0 %v180
    %196 = vmatpush.bf16.msra.mxu0 %v179
    %197 = vmatpush.bf16.msra.mxu0 %v178
    %198 = vmatpush.bf16.msra.mxu0 %v177
    %199 = vmatpush.bf16.msra.mxu0 %v176
    %200 = vmatmul.bf16.gmra.mxu0 %v137
    %v201 = vpop.f32.mrf.mxu0
    %v202 = vadd.f32 %v142, %v201
    %v203 = vpop.f32.mrf.mxu0
    %v204 = vadd.f32 %v142, %v203
    %205 = vmatmul.bf16.gmra.mxu0 %v138
    %v206 = vpop.f32.mrf.mxu0
    %v207 = vadd.f32 %v142, %v206
    %v208 = vpop.f32.mrf.mxu0
    %v209 = vadd.f32 %v142, %v208
    %210 = vmatmul.bf16.gmra.mxu0 %v139
    %v211 = vpop.f32.mrf.mxu0
    %v212 = vadd.f32 %v142, %v211
    %v213 = vpop.f32.mrf.mxu0
    %v214 = vadd.f32 %v142, %v213
    %215 = vmatmul.bf16.gmra.mxu0 %v140
    %v216 = vpop.f32.mrf.mxu0
    %v217 = vadd.f32 %v142, %v216
    %v218 = vpop.f32.mrf.mxu0
    %v219 = vadd.f32 %v142, %v218
    %220 = vdwg.mxu0
    %221 = vst [vmem:[#allocation2] sm:$0xff] %v202
    %222 = vst [vmem:[#allocation2 + $0x8] sm:$0xff] %v204
    %223 = vst [vmem:[#allocation2 + $0x10] sm:$0xff] %v207
    %224 = vst [vmem:[#allocation2 + $0x18] sm:$0xff] %v209
    %225 = vst [vmem:[#allocation2 + $0x20] sm:$0xff] %v212
    %226 = vst [vmem:[#allocation2 + $0x28] sm:$0xff] %v214
    %227 = vst [vmem:[#allocation2 + $0x30] sm:$0xff] %v217
    %228 = vst [vmem:[#allocation2 + $0x38] sm:$0xff] %v219
    %v229 = vld [vmem:[#allocation2] sm:$0xff]
    %v246 = vunpack.c.l.b16 %v112
    %v247 = vunpack.c.l.b16 %v113
    %v248 = vunpack.c.l.b16 %v114
    %v249 = vunpack.c.l.b16 %v115
    %v250 = vunpack.c.l.b16 %v116
    %v251 = vunpack.c.l.b16 %v117
    %v252 = vunpack.c.l.b16 %v118
    %v253 = vunpack.c.l.b16 %v119
    %v254 = vunpack.c.l.b16 %v120
    %v255 = vunpack.c.l.b16 %v121
    %v256 = vunpack.c.l.b16 %v122
    %v257 = vunpack.c.l.b16 %v123
    %v258 = vunpack.c.l.b16 %v124
    %v259 = vunpack.c.l.b16 %v125
    %v260 = vunpack.c.l.b16 %v126
    %v261 = vunpack.c.l.b16 %v127
    %v262 = vpack.c.b16 %v247, %v246
    %v263 = vpack.c.b16 %v249, %v248
    %v264 = vpack.c.b16 %v251, %v250
    %v265 = vpack.c.b16 %v253, %v252
    %v266 = vpack.c.b16 %v255, %v254
    %v267 = vpack.c.b16 %v257, %v256
    %v268 = vpack.c.b16 %v259, %v258
    %v269 = vpack.c.b16 %v261, %v260
    %278 = vmatpush.bf16.msra.mxu0 %v269
    %279 = vmatpush.bf16.msra.mxu0 %v268
    %280 = vmatpush.bf16.msra.mxu0 %v267
    %281 = vmatpush.bf16.msra.mxu0 %v266
    %282 = vmatpush.bf16.msra.mxu0 %v265
    %283 = vmatpush.bf16.msra.mxu0 %v264
    %284 = vmatpush.bf16.msra.mxu0 %v263
    %285 = vmatpush.bf16.msra.mxu0 %v262
    %286 = vmatmul.bf16.gmra.mxu0 0
    %v287 = vpop.f32.mrf.mxu0
    %v288 = vadd.f32 0.0, %v287
    %v289 = vpop.f32.mrf.mxu0
    %290 = vdwg.mxu0
    %v291 = vadd.f32 %v229, %v288
    %v292 = vtanh.pop %v291
    %293 = vrot.lane.b32.xlu0 %v292, 96
    %v294 = vpop.permute.xlu0 %293
    %295 = vrot.lane.b32.xlu0 %v292, 64
    %v296 = vpop.permute.xlu0 %295
    %297 = vrot.lane.b32.xlu0 %v292, 32
    %v298 = vpop.permute.xlu0 %297
    %v299 = vmul.f32 %v294, 0.5
    %v300 = vadd.f32 %v299, 0.5
    %v301 = vmul.f32 %v300, 0.0
    %v302 = vmul.f32 %v292, 0.5
    %v303 = vadd.f32 %v302, 0.5
    %v304 = vmul.f32 %v303, %v296
    %v305 = vadd.f32 %v301, %v304
    %v306 = vmul.f32 %v298, 0.5
    %v307 = vadd.f32 %v306, 0.5
    %v308 = vtanh.pop %v305
    %v309 = vmul.f32 %v307, %v308
    %310 = vst [vmem:[#allocation3] sm:$0xff] %v309
    %v311 = vld [vmem:[#allocation2 + $0x8] sm:$0xff]
    %v312 = vpack.c.bf16 %v309, %v309
    %313 = vmatpush.bf16.msra.mxu0 %v269
    %314 = vmatpush.bf16.msra.mxu0 %v268
    %315 = vmatpush.bf16.msra.mxu0 %v267
    %316 = vmatpush.bf16.msra.mxu0 %v266
    %317 = vmatpush.bf16.msra.mxu0 %v265
    %318 = vmatpush.bf16.msra.mxu0 %v264
    %319 = vmatpush.bf16.msra.mxu0 %v263
    %320 = vmatpush.bf16.msra.mxu0 %v262
    %321 = vmatmul.bf16.gmra.mxu0 %v312
    %v322 = vpop.f32.mrf.mxu0
    %v323 = vadd.f32 0.0, %v322
    %v324 = vpop.f32.mrf.mxu0
    %325 = vdwg.mxu0
    %v326 = vadd.f32 %v311, %v323
    %v327 = vtanh.pop %v326
    %328 = vrot.lane.b32.xlu0 %v327, 96
    %v329 = vpop.permute.xlu0 %328
    %330 = vrot.lane.b32.xlu0 %v327, 64
    %v331 = vpop.permute.xlu0 %330
    %332 = vrot.lane.b32.xlu0 %v327, 32
    %v333 = vpop.permute.xlu0 %332
    %v334 = vmul.f32 %v329, 0.5
    %v335 = vadd.f32 %v334, 0.5
    %v336 = vmul.f32 %v335, %v305
    %v337 = vmul.f32 %v327, 0.5
    %v338 = vadd.f32 %v337, 0.5
    %v339 = vmul.f32 %v338, %v331
    %v340 = vadd.f32 %v336, %v339
    %v341 = vmul.f32 %v333, 0.5
    %v342 = vadd.f32 %v341, 0.5
    %v343 = vtanh.pop %v340
    %v344 = vmul.f32 %v342, %v343
    %345 = vst [vmem:[#allocation3 + $0x8] sm:$0xff] %v344
    %v346 = vld [vmem:[#allocation2 + $0x10] sm:$0xff]
    %v347 = vpack.c.bf16 %v344, %v344
    %348 = vmatpush.bf16.msra.mxu0 %v269
    %349 = vmatpush.bf16.msra.mxu0 %v268
    %350 = vmatpush.bf16.msra.mxu0 %v267
    %351 = vmatpush.bf16.msra.mxu0 %v266
    %352 = vmatpush.bf16.msra.mxu0 %v265
    %353 = vmatpush.bf16.msra.mxu0 %v264
    %354 = vmatpush.bf16.msra.mxu0 %v263
    %355 = vmatpush.bf16.msra.mxu0 %v262
    %356 = vmatmul.bf16.gmra.mxu0 %v347
    %v357 = vpop.f32.mrf.mxu0
    %v358 = vadd.f32 0.0, %v357
    %v359 = vpop.f32.mrf.mxu0
    %360 = vdwg.mxu0
    %v361 = vadd.f32 %v346, %v358
    %v362 = vtanh.pop %v361
    %363 = vrot.lane.b32.xlu0 %v362, 96
    %v364 = vpop.permute.xlu0 %363
    %365 = vrot.lane.b32.xlu0 %v362, 64
    %v366 = vpop.permute.xlu0 %365
    %367 = vrot.lane.b32.xlu0 %v362, 32
    %v368 = vpop.permute.xlu0 %367
    %v369 = vmul.f32 %v364, 0.5
    %v370 = vadd.f32 %v369, 0.5
    %v371 = vmul.f32 %v370, %v340
    %v372 = vmul.f32 %v362, 0.5
    %v373 = vadd.f32 %v372, 0.5
    %v374 = vmul.f32 %v373, %v366
    %v375 = vadd.f32 %v371, %v374
    %v376 = vmul.f32 %v368, 0.5
    %v377 = vadd.f32 %v376, 0.5
    %v378 = vtanh.pop %v375
    %v379 = vmul.f32 %v377, %v378
    %380 = vst [vmem:[#allocation3 + $0x10] sm:$0xff] %v379
    %v381 = vld [vmem:[#allocation2 + $0x18] sm:$0xff]
    %v382 = vpack.c.bf16 %v379, %v379
    %383 = vmatpush.bf16.msra.mxu0 %v269
    %384 = vmatpush.bf16.msra.mxu0 %v268
    %385 = vmatpush.bf16.msra.mxu0 %v267
    %386 = vmatpush.bf16.msra.mxu0 %v266
    %387 = vmatpush.bf16.msra.mxu0 %v265
    %388 = vmatpush.bf16.msra.mxu0 %v264
    %389 = vmatpush.bf16.msra.mxu0 %v263
    %390 = vmatpush.bf16.msra.mxu0 %v262
    %391 = vmatmul.bf16.gmra.mxu0 %v382
    %v392 = vpop.f32.mrf.mxu0
    %v393 = vadd.f32 0.0, %v392
    %v394 = vpop.f32.mrf.mxu0
    %395 = vdwg.mxu0
    %v396 = vadd.f32 %v381, %v393
    %v397 = vtanh.pop %v396
    %398 = vrot.lane.b32.xlu0 %v397, 96
    %v399 = vpop.permute.xlu0 %398
    %400 = vrot.lane.b32.xlu0 %v397, 64
    %v401 = vpop.permute.xlu0 %400
    %402 = vrot.lane.b32.xlu0 %v397, 32
    %v403 = vpop.permute.xlu0 %402
    %v404 = vmul.f32 %v399, 0.5
    %v405 = vadd.f32 %v404, 0.5
    %v406 = vmul.f32 %v405, %v375
    %v407 = vmul.f32 %v397, 0.5
    %v408 = vadd.f32 %v407, 0.5
    %v409 = vmul.f32 %v408, %v401
    %v410 = vadd.f32 %v406, %v409
    %v411 = vmul.f32 %v403, 0.5
    %v412 = vadd.f32 %v411, 0.5
    %v413 = vtanh.pop %v410
    %v414 = vmul.f32 %v412, %v413
    %415 = vst [vmem:[#allocation3 + $0x18] sm:$0xff] %v414
    %v416 = vld [vmem:[#allocation2 + $0x20] sm:$0xff]
    %v417 = vpack.c.bf16 %v414, %v414
    %418 = vmatpush.bf16.msra.mxu0 %v269
    %419 = vmatpush.bf16.msra.mxu0 %v268
    %420 = vmatpush.bf16.msra.mxu0 %v267
    %421 = vmatpush.bf16.msra.mxu0 %v266
    %422 = vmatpush.bf16.msra.mxu0 %v265
    %423 = vmatpush.bf16.msra.mxu0 %v264
    %424 = vmatpush.bf16.msra.mxu0 %v263
    %425 = vmatpush.bf16.msra.mxu0 %v262
    %426 = vmatmul.bf16.gmra.mxu0 %v417
    %v427 = vpop.f32.mrf.mxu0
    %v428 = vadd.f32 0.0, %v427
    %v429 = vpop.f32.mrf.mxu0
    %430 = vdwg.mxu0
    %v431 = vadd.f32 %v416, %v428
    %v432 = vtanh.pop %v431
    %433 = vrot.lane.b32.xlu0 %v432, 96
    %v434 = vpop.permute.xlu0 %433
    %435 = vrot.lane.b32.xlu0 %v432, 64
    %v436 = vpop.permute.xlu0 %435
    %437 = vrot.lane.b32.xlu0 %v432, 32
    %v438 = vpop.permute.xlu0 %437
    %v439 = vmul.f32 %v434, 0.5
    %v440 = vadd.f32 %v439, 0.5
    %v441 = vmul.f32 %v440, %v410
    %v442 = vmul.f32 %v432, 0.5
    %v443 = vadd.f32 %v442, 0.5
    %v444 = vmul.f32 %v443, %v436
    %v445 = vadd.f32 %v441, %v444
    %v446 = vmul.f32 %v438, 0.5
    %v447 = vadd.f32 %v446, 0.5
    %v448 = vtanh.pop %v445
    %v449 = vmul.f32 %v447, %v448
    %450 = vst [vmem:[#allocation3 + $0x20] sm:$0xff] %v449
    %v451 = vld [vmem:[#allocation2 + $0x28] sm:$0xff]
    %v452 = vpack.c.bf16 %v449, %v449
    %453 = vmatpush.bf16.msra.mxu0 %v269
    %454 = vmatpush.bf16.msra.mxu0 %v268
    %455 = vmatpush.bf16.msra.mxu0 %v267
    %456 = vmatpush.bf16.msra.mxu0 %v266
    %457 = vmatpush.bf16.msra.mxu0 %v265
    %458 = vmatpush.bf16.msra.mxu0 %v264
    %459 = vmatpush.bf16.msra.mxu0 %v263
    %460 = vmatpush.bf16.msra.mxu0 %v262
    %461 = vmatmul.bf16.gmra.mxu0 %v452
    %v462 = vpop.f32.mrf.mxu0
    %v463 = vadd.f32 0.0, %v462
    %v464 = vpop.f32.mrf.mxu0
    %465 = vdwg.mxu0
    %v466 = vadd.f32 %v451, %v463
    %v467 = vtanh.pop %v466
    %468 = vrot.lane.b32.xlu0 %v467, 96
    %v469 = vpop.permute.xlu0 %468
    %470 = vrot.lane.b32.xlu0 %v467, 64
    %v471 = vpop.permute.xlu0 %470
    %472 = vrot.lane.b32.xlu0 %v467, 32
    %v473 = vpop.permute.xlu0 %472
    %v474 = vmul.f32 %v469, 0.5
    %v475 = vadd.f32 %v474, 0.5
    %v476 = vmul.f32 %v475, %v445
    %v477 = vmul.f32 %v467, 0.5
    %v478 = vadd.f32 %v477, 0.5
    %v479 = vmul.f32 %v478, %v471
    %v480 = vadd.f32 %v476, %v479
    %v481 = vmul.f32 %v473, 0.5
    %v482 = vadd.f32 %v481, 0.5
    %v483 = vtanh.pop %v480
    %v484 = vmul.f32 %v482, %v483
    %485 = vst [vmem:[#allocation3 + $0x28] sm:$0xff] %v484
    %v486 = vld [vmem:[#allocation2 + $0x30] sm:$0xff]
    %v487 = vpack.c.bf16 %v484, %v484
    %488 = vmatpush.bf16.msra.mxu0 %v269
    %489 = vmatpush.bf16.msra.mxu0 %v268
    %490 = vmatpush.bf16.msra.mxu0 %v267
    %491 = vmatpush.bf16.msra.mxu0 %v266
    %492 = vmatpush.bf16.msra.mxu0 %v265
    %493 = vmatpush.bf16.msra.mxu0 %v264
    %494 = vmatpush.bf16.msra.mxu0 %v263
    %495 = vmatpush.bf16.msra.mxu0 %v262
    %496 = vmatmul.bf16.gmra.mxu0 %v487
    %v497 = vpop.f32.mrf.mxu0
    %v498 = vadd.f32 0.0, %v497
    %v499 = vpop.f32.mrf.mxu0
    %500 = vdwg.mxu0
    %v501 = vadd.f32 %v486, %v498
    %v502 = vtanh.pop %v501
    %503 = vrot.lane.b32.xlu0 %v502, 96
    %v504 = vpop.permute.xlu0 %503
    %505 = vrot.lane.b32.xlu0 %v502, 64
    %v506 = vpop.permute.xlu0 %505
    %507 = vrot.lane.b32.xlu0 %v502, 32
    %v508 = vpop.permute.xlu0 %507
    %v509 = vmul.f32 %v504, 0.5
    %v510 = vadd.f32 %v509, 0.5
    %v511 = vmul.f32 %v510, %v480
    %v512 = vmul.f32 %v502, 0.5
    %v513 = vadd.f32 %v512, 0.5
    %v514 = vmul.f32 %v513, %v506
    %v515 = vadd.f32 %v511, %v514
    %v516 = vmul.f32 %v508, 0.5
    %v517 = vadd.f32 %v516, 0.5
    %v518 = vtanh.pop %v515
    %v519 = vmul.f32 %v517, %v518
    %520 = vst [vmem:[#allocation3 + $0x30] sm:$0xff] %v519
    %v521 = vld [vmem:[#allocation2 + $0x38] sm:$0xff]
    %v522 = vpack.c.bf16 %v519, %v519
    %523 = vmatpush.bf16.msra.mxu0 %v269
    %524 = vmatpush.bf16.msra.mxu0 %v268
    %525 = vmatpush.bf16.msra.mxu0 %v267
    %526 = vmatpush.bf16.msra.mxu0 %v266
    %527 = vmatpush.bf16.msra.mxu0 %v265
    %528 = vmatpush.bf16.msra.mxu0 %v264
    %529 = vmatpush.bf16.msra.mxu0 %v263
    %530 = vmatpush.bf16.msra.mxu0 %v262
    %531 = vmatmul.bf16.gmra.mxu0 %v522
    %v532 = vpop.f32.mrf.mxu0
    %v533 = vadd.f32 0.0, %v532
    %v534 = vpop.f32.mrf.mxu0
    %535 = vdwg.mxu0
    %v536 = vadd.f32 %v521, %v533
    %v537 = vtanh.pop %v536
    %538 = vrot.lane.b32.xlu0 %v537, 96
    %v539 = vpop.permute.xlu0 %538
    %540 = vrot.lane.b32.xlu0 %v537, 64
    %v541 = vpop.permute.xlu0 %540
    %542 = vrot.lane.b32.xlu0 %v537, 32
    %v543 = vpop.permute.xlu0 %542
    %v544 = vmul.f32 %v539, 0.5
    %v545 = vadd.f32 %v544, 0.5
    %v546 = vmul.f32 %v545, %v515
    %v547 = vmul.f32 %v537, 0.5
    %v548 = vadd.f32 %v547, 0.5
    %v549 = vmul.f32 %v548, %v541
    %v550 = vadd.f32 %v546, %v549
    %v551 = vmul.f32 %v543, 0.5
    %v552 = vadd.f32 %v551, 0.5
    %v553 = vtanh.pop %v550
    %v554 = vmul.f32 %v552, %v553
    %555 = vst [vmem:[#allocation3 + $0x38] sm:$0xff] %v554
    %v556 = vld [vmem:[#allocation6] sm:$0xf]
    %v557 = vld [vmem:[#allocation6 + $0x4] sm:$0xf]
    %v558 = vld [vmem:[#allocation6 + $0x8] sm:$0xf]
    %v559 = vld [vmem:[#allocation6 + $0xc] sm:$0xf]
    %v560 = vld [vmem:[#allocation6 + $0x10] sm:$0xf]
    %v561 = vld [vmem:[#allocation6 + $0x14] sm:$0xf]
    %v562 = vld [vmem:[#allocation6 + $0x18] sm:$0xf]
    %v563 = vld [vmem:[#allocation6 + $0x1c] sm:$0xf]
    %v564 = vld [vmem:[#allocation6 + $0x20] sm:$0xf]
    %v565 = vld [vmem:[#allocation6 + $0x24] sm:$0xf]
    %v566 = vld [vmem:[#allocation6 + $0x28] sm:$0xf]
    %v567 = vld [vmem:[#allocation6 + $0x2c] sm:$0xf]
    %v568 = vld [vmem:[#allocation6 + $0x30] sm:$0xf]
    %v569 = vld [vmem:[#allocation6 + $0x34] sm:$0xf]
    %v570 = vld [vmem:[#allocation6 + $0x38] sm:$0xf]
    %v571 = vld [vmem:[#allocation6 + $0x3c] sm:$0xf]
    %v572 = vld [vmem:[#allocation8] sm:$0xf]
    %v573 = vld [vmem:[#allocation8 + $0x4] sm:$0xf]
    %v574 = vld [vmem:[#allocation8 + $0x8] sm:$0xf]
    %v575 = vld [vmem:[#allocation8 + $0xc] sm:$0xf]
    %v576 = vld [vmem:[#allocation8 + $0x10] sm:$0xf]
    %v577 = vld [vmem:[#allocation8 + $0x14] sm:$0xf]
    %v578 = vld [vmem:[#allocation8 + $0x18] sm:$0xf]
    %v579 = vld [vmem:[#allocation8 + $0x1c] sm:$0xf]
    %v580 = vld [vmem:[#allocation8 + $0x20] sm:$0xf]
    %v581 = vld [vmem:[#allocation8 + $0x24] sm:$0xf]
    %v582 = vld [vmem:[#allocation8 + $0x28] sm:$0xf]
    %v583 = vld [vmem:[#allocation8 + $0x2c] sm:$0xf]
    %v584 = vld [vmem:[#allocation8 + $0x30] sm:$0xf]
    %v585 = vld [vmem:[#allocation8 + $0x34] sm:$0xf]
    %v586 = vld [vmem:[#allocation8 + $0x38] sm:$0xf]
    %v587 = vld [vmem:[#allocation8 + $0x3c] sm:$0xf]
    %v588 = vld [vmem:[%s6] sm:$0x1]
    %v589 = vld [vmem:[#allocation3] sm:$0xff]
    %v590 = vld [vmem:[#allocation3 + $0x8] sm:$0xff]
    %v591 = vld [vmem:[#allocation3 + $0x10] sm:$0xff]
    %v592 = vld [vmem:[#allocation3 + $0x18] sm:$0xff]
    %v593 = vld [vmem:[#allocation3 + $0x20] sm:$0xff]
    %v594 = vld [vmem:[#allocation3 + $0x28] sm:$0xff]
    %v595 = vld [vmem:[#allocation3 + $0x30] sm:$0xff]
    %v596 = vld [vmem:[#allocation3 + $0x38] sm:$0xff]
    %v597 = vpack.c.bf16 %v590, %v589
    %v598 = vpack.c.bf16 %v592, %v591
    %v599 = vpack.c.bf16 %v594, %v593
    %v600 = vpack.c.bf16 %v596, %v595
    %v602 = vperm.slane %v588, 0
    %v620 = vunpack.c.l.b16 %v556
    %v621 = vunpack.c.l.b16 %v557
    %v622 = vunpack.c.l.b16 %v558
    %v623 = vunpack.c.l.b16 %v559
    %v624 = vunpack.c.l.b16 %v560
    %v625 = vunpack.c.l.b16 %v561
    %v626 = vunpack.c.l.b16 %v562
    %v627 = vunpack.c.l.b16 %v563
    %v628 = vunpack.c.l.b16 %v564
    %v629 = vunpack.c.l.b16 %v565
    %v630 = vunpack.c.l.b16 %v566
    %v631 = vunpack.c.l.b16 %v567
    %v632 = vunpack.c.l.b16 %v568
    %v633 = vunpack.c.l.b16 %v569
    %v634 = vunpack.c.l.b16 %v570
    %v635 = vunpack.c.l.b16 %v571
    %v636 = vpack.c.b16 %v621, %v620
    %v637 = vpack.c.b16 %v623, %v622
    %v638 = vpack.c.b16 %v625, %v624
    %v639 = vpack.c.b16 %v627, %v626
    %v640 = vpack.c.b16 %v629, %v628
    %v641 = vpack.c.b16 %v631, %v630
    %v642 = vpack.c.b16 %v633, %v632
    %v643 = vpack.c.b16 %v635, %v634
    %652 = vmatpush.bf16.msra.mxu0 %v643
    %653 = vmatpush.bf16.msra.mxu0 %v642
    %654 = vmatpush.bf16.msra.mxu0 %v641
    %655 = vmatpush.bf16.msra.mxu0 %v640
    %656 = vmatpush.bf16.msra.mxu0 %v639
    %657 = vmatpush.bf16.msra.mxu0 %v638
    %658 = vmatpush.bf16.msra.mxu0 %v637
    %659 = vmatpush.bf16.msra.mxu0 %v636
    %660 = vmatmul.bf16.gmra.mxu0 %v597
    %v661 = vpop.f32.mrf.mxu0
    %v662 = vadd.f32 %v602, %v661
    %v663 = vpop.f32.mrf.mxu0
    %v664 = vadd.f32 %v602, %v663
    %665 = vmatmul.bf16.gmra.mxu0 %v598
    %v666 = vpop.f32.mrf.mxu0
    %v667 = vadd.f32 %v602, %v666
    %v668 = vpop.f32.mrf.mxu0
    %v669 = vadd.f32 %v602, %v668
    %670 = vmatmul.bf16.gmra.mxu0 %v599
    %v671 = vpop.f32.mrf.mxu0
    %v672 = vadd.f32 %v602, %v671
    %v673 = vpop.f32.mrf.mxu0
    %v674 = vadd.f32 %v602, %v673
    %675 = vmatmul.bf16.gmra.mxu0 %v600
    %v676 = vpop.f32.mrf.mxu0
    %v677 = vadd.f32 %v602, %v676
    %v678 = vpop.f32.mrf.mxu0
    %v679 = vadd.f32 %v602, %v678
    %680 = vdwg.mxu0
    %681 = vst [vmem:[#allocation2] sm:$0xff] %v662
    %682 = vst [vmem:[#allocation2 + $0x8] sm:$0xff] %v664
    %683 = vst [vmem:[#allocation2 + $0x10] sm:$0xff] %v667
    %684 = vst [vmem:[#allocation2 + $0x18] sm:$0xff] %v669
    %685 = vst [vmem:[#allocation2 + $0x20] sm:$0xff] %v672
    %686 = vst [vmem:[#allocation2 + $0x28] sm:$0xff] %v674
    %687 = vst [vmem:[#allocation2 + $0x30] sm:$0xff] %v677
    %688 = vst [vmem:[#allocation2 + $0x38] sm:$0xff] %v679
    %v689 = vld [vmem:[#allocation2] sm:$0xff]
    %v706 = vunpack.c.l.b16 %v572
    %v707 = vunpack.c.l.b16 %v573
    %v708 = vunpack.c.l.b16 %v574
    %v709 = vunpack.c.l.b16 %v575
    %v710 = vunpack.c.l.b16 %v576
    %v711 = vunpack.c.l.b16 %v577
    %v712 = vunpack.c.l.b16 %v578
    %v713 = vunpack.c.l.b16 %v579
    %v714 = vunpack.c.l.b16 %v580
    %v715 = vunpack.c.l.b16 %v581
    %v716 = vunpack.c.l.b16 %v582
    %v717 = vunpack.c.l.b16 %v583
    %v718 = vunpack.c.l.b16 %v584
    %v719 = vunpack.c.l.b16 %v585
    %v720 = vunpack.c.l.b16 %v586
    %v721 = vunpack.c.l.b16 %v587
    %v722 = vpack.c.b16 %v707, %v706
    %v723 = vpack.c.b16 %v709, %v708
    %v724 = vpack.c.b16 %v711, %v710
    %v725 = vpack.c.b16 %v713, %v712
    %v726 = vpack.c.b16 %v715, %v714
    %v727 = vpack.c.b16 %v717, %v716
    %v728 = vpack.c.b16 %v719, %v718
    %v729 = vpack.c.b16 %v721, %v720
    %738 = vmatpush.bf16.msra.mxu0 %v729
    %739 = vmatpush.bf16.msra.mxu0 %v728
    %740 = vmatpush.bf16.msra.mxu0 %v727
    %741 = vmatpush.bf16.msra.mxu0 %v726
    %742 = vmatpush.bf16.msra.mxu0 %v725
    %743 = vmatpush.bf16.msra.mxu0 %v724
    %744 = vmatpush.bf16.msra.mxu0 %v723
    %745 = vmatpush.bf16.msra.mxu0 %v722
    %746 = vmatmul.bf16.gmra.mxu0 0
    %v747 = vpop.f32.mrf.mxu0
    %v748 = vadd.f32 0.0, %v747
    %v749 = vpop.f32.mrf.mxu0
    %750 = vdwg.mxu0
    %v751 = vadd.f32 %v689, %v748
    %v752 = vtanh.pop %v751
    %753 = vrot.lane.b32.xlu0 %v752, 96
    %v754 = vpop.permute.xlu0 %753
    %755 = vrot.lane.b32.xlu0 %v752, 64
    %v756 = vpop.permute.xlu0 %755
    %757 = vrot.lane.b32.xlu0 %v752, 32
    %v758 = vpop.permute.xlu0 %757
    %v759 = vmul.f32 %v754, 0.5
    %v760 = vadd.f32 %v759, 0.5
    %v761 = vmul.f32 %v760, 0.0
    %v762 = vmul.f32 %v752, 0.5
    %v763 = vadd.f32 %v762, 0.5
    %v764 = vmul.f32 %v763, %v756
    %v765 = vadd.f32 %v761, %v764
    %v766 = vmul.f32 %v758, 0.5
    %v767 = vadd.f32 %v766, 0.5
    %v768 = vtanh.pop %v765
    %v769 = vmul.f32 %v767, %v768
    %v770 = vld [vmem:[#allocation2 + $0x8] sm:$0xff]
    %v771 = vpack.c.bf16 %v769, %v769
    %772 = vmatpush.bf16.msra.mxu0 %v729
    %773 = vmatpush.bf16.msra.mxu0 %v728
    %774 = vmatpush.bf16.msra.mxu0 %v727
    %775 = vmatpush.bf16.msra.mxu0 %v726
    %776 = vmatpush.bf16.msra.mxu0 %v725
    %777 = vmatpush.bf16.msra.mxu0 %v724
    %778 = vmatpush.bf16.msra.mxu0 %v723
    %779 = vmatpush.bf16.msra.mxu0 %v722
    %780 = vmatmul.bf16.gmra.mxu0 %v771
    %v781 = vpop.f32.mrf.mxu0
    %v782 = vadd.f32 0.0, %v781
    %v783 = vpop.f32.mrf.mxu0
    %784 = vdwg.mxu0
    %v785 = vadd.f32 %v770, %v782
    %v786 = vtanh.pop %v785
    %787 = vrot.lane.b32.xlu0 %v786, 96
    %v788 = vpop.permute.xlu0 %787
    %789 = vrot.lane.b32.xlu0 %v786, 64
    %v790 = vpop.permute.xlu0 %789
    %791 = vrot.lane.b32.xlu0 %v786, 32
    %v792 = vpop.permute.xlu0 %791
    %v793 = vmul.f32 %v788, 0.5
    %v794 = vadd.f32 %v793, 0.5
    %v795 = vmul.f32 %v794, %v765
    %v796 = vmul.f32 %v786, 0.5
    %v797 = vadd.f32 %v796, 0.5
    %v798 = vmul.f32 %v797, %v790
    %v799 = vadd.f32 %v795, %v798
    %v800 = vmul.f32 %v792, 0.5
    %v801 = vadd.f32 %v800, 0.5
    %v802 = vtanh.pop %v799
    %v803 = vmul.f32 %v801, %v802
    %v804 = vld [vmem:[#allocation2 + $0x10] sm:$0xff]
    %v805 = vpack.c.bf16 %v803, %v803
    %806 = vmatpush.bf16.msra.mxu0 %v729
    %807 = vmatpush.bf16.msra.mxu0 %v728
    %808 = vmatpush.bf16.msra.mxu0 %v727
    %809 = vmatpush.bf16.msra.mxu0 %v726
    %810 = vmatpush.bf16.msra.mxu0 %v725
    %811 = vmatpush.bf16.msra.mxu0 %v724
    %812 = vmatpush.bf16.msra.mxu0 %v723
    %813 = vmatpush.bf16.msra.mxu0 %v722
    %814 = vmatmul.bf16.gmra.mxu0 %v805
    %v815 = vpop.f32.mrf.mxu0
    %v816 = vadd.f32 0.0, %v815
    %v817 = vpop.f32.mrf.mxu0
    %818 = vdwg.mxu0
    %v819 = vadd.f32 %v804, %v816
    %v820 = vtanh.pop %v819
    %821 = vrot.lane.b32.xlu0 %v820, 96
    %v822 = vpop.permute.xlu0 %821
    %823 = vrot.lane.b32.xlu0 %v820, 64
    %v824 = vpop.permute.xlu0 %823
    %825 = vrot.lane.b32.xlu0 %v820, 32
    %v826 = vpop.permute.xlu0 %825
    %v827 = vmul.f32 %v822, 0.5
    %v828 = vadd.f32 %v827, 0.5
    %v829 = vmul.f32 %v828, %v799
    %v830 = vmul.f32 %v820, 0.5
    %v831 = vadd.f32 %v830, 0.5
    %v832 = vmul.f32 %v831, %v824
    %v833 = vadd.f32 %v829, %v832
    %v834 = vmul.f32 %v826, 0.5
    %v835 = vadd.f32 %v834, 0.5
    %v836 = vtanh.pop %v833
    %v837 = vmul.f32 %v835, %v836
    %v838 = vld [vmem:[#allocation2 + $0x18] sm:$0xff]
    %v839 = vpack.c.bf16 %v837, %v837
    %840 = vmatpush.bf16.msra.mxu0 %v729
    %841 = vmatpush.bf16.msra.mxu0 %v728
    %842 = vmatpush.bf16.msra.mxu0 %v727
    %843 = vmatpush.bf16.msra.mxu0 %v726
    %844 = vmatpush.bf16.msra.mxu0 %v725
    %845 = vmatpush.bf16.msra.mxu0 %v724
    %846 = vmatpush.bf16.msra.mxu0 %v723
    %847 = vmatpush.bf16.msra.mxu0 %v722
    %848 = vmatmul.bf16.gmra.mxu0 %v839
    %v849 = vpop.f32.mrf.mxu0
    %v850 = vadd.f32 0.0, %v849
    %v851 = vpop.f32.mrf.mxu0
    %852 = vdwg.mxu0
    %v853 = vadd.f32 %v838, %v850
    %v854 = vtanh.pop %v853
    %855 = vrot.lane.b32.xlu0 %v854, 96
    %v856 = vpop.permute.xlu0 %855
    %857 = vrot.lane.b32.xlu0 %v854, 64
    %v858 = vpop.permute.xlu0 %857
    %859 = vrot.lane.b32.xlu0 %v854, 32
    %v860 = vpop.permute.xlu0 %859
    %v861 = vmul.f32 %v856, 0.5
    %v862 = vadd.f32 %v861, 0.5
    %v863 = vmul.f32 %v862, %v833
    %v864 = vmul.f32 %v854, 0.5
    %v865 = vadd.f32 %v864, 0.5
    %v866 = vmul.f32 %v865, %v858
    %v867 = vadd.f32 %v863, %v866
    %v868 = vmul.f32 %v860, 0.5
    %v869 = vadd.f32 %v868, 0.5
    %v870 = vtanh.pop %v867
    %v871 = vmul.f32 %v869, %v870
    %v872 = vld [vmem:[#allocation2 + $0x20] sm:$0xff]
    %v873 = vpack.c.bf16 %v871, %v871
    %874 = vmatpush.bf16.msra.mxu0 %v729
    %875 = vmatpush.bf16.msra.mxu0 %v728
    %876 = vmatpush.bf16.msra.mxu0 %v727
    %877 = vmatpush.bf16.msra.mxu0 %v726
    %878 = vmatpush.bf16.msra.mxu0 %v725
    %879 = vmatpush.bf16.msra.mxu0 %v724
    %880 = vmatpush.bf16.msra.mxu0 %v723
    %881 = vmatpush.bf16.msra.mxu0 %v722
    %882 = vmatmul.bf16.gmra.mxu0 %v873
    %v883 = vpop.f32.mrf.mxu0
    %v884 = vadd.f32 0.0, %v883
    %v885 = vpop.f32.mrf.mxu0
    %886 = vdwg.mxu0
    %v887 = vadd.f32 %v872, %v884
    %v888 = vtanh.pop %v887
    %889 = vrot.lane.b32.xlu0 %v888, 96
    %v890 = vpop.permute.xlu0 %889
    %891 = vrot.lane.b32.xlu0 %v888, 64
    %v892 = vpop.permute.xlu0 %891
    %893 = vrot.lane.b32.xlu0 %v888, 32
    %v894 = vpop.permute.xlu0 %893
    %v895 = vmul.f32 %v890, 0.5
    %v896 = vadd.f32 %v895, 0.5
    %v897 = vmul.f32 %v896, %v867
    %v898 = vmul.f32 %v888, 0.5
    %v899 = vadd.f32 %v898, 0.5
    %v900 = vmul.f32 %v899, %v892
    %v901 = vadd.f32 %v897, %v900
    %v902 = vmul.f32 %v894, 0.5
    %v903 = vadd.f32 %v902, 0.5
    %v904 = vtanh.pop %v901
    %v905 = vmul.f32 %v903, %v904
    %v906 = vld [vmem:[#allocation2 + $0x28] sm:$0xff]
    %v907 = vpack.c.bf16 %v905, %v905
    %908 = vmatpush.bf16.msra.mxu0 %v729
    %909 = vmatpush.bf16.msra.mxu0 %v728
    %910 = vmatpush.bf16.msra.mxu0 %v727
    %911 = vmatpush.bf16.msra.mxu0 %v726
    %912 = vmatpush.bf16.msra.mxu0 %v725
    %913 = vmatpush.bf16.msra.mxu0 %v724
    %914 = vmatpush.bf16.msra.mxu0 %v723
    %915 = vmatpush.bf16.msra.mxu0 %v722
    %916 = vmatmul.bf16.gmra.mxu0 %v907
    %v917 = vpop.f32.mrf.mxu0
    %v918 = vadd.f32 0.0, %v917
    %v919 = vpop.f32.mrf.mxu0
    %920 = vdwg.mxu0
    %v921 = vadd.f32 %v906, %v918
    %v922 = vtanh.pop %v921
    %923 = vrot.lane.b32.xlu0 %v922, 96
    %v924 = vpop.permute.xlu0 %923
    %925 = vrot.lane.b32.xlu0 %v922, 64
    %v926 = vpop.permute.xlu0 %925
    %927 = vrot.lane.b32.xlu0 %v922, 32
    %v928 = vpop.permute.xlu0 %927
    %v929 = vmul.f32 %v924, 0.5
    %v930 = vadd.f32 %v929, 0.5
    %v931 = vmul.f32 %v930, %v901
    %v932 = vmul.f32 %v922, 0.5
    %v933 = vadd.f32 %v932, 0.5
    %v934 = vmul.f32 %v933, %v926
    %v935 = vadd.f32 %v931, %v934
    %v936 = vmul.f32 %v928, 0.5
    %v937 = vadd.f32 %v936, 0.5
    %v938 = vtanh.pop %v935
    %v939 = vmul.f32 %v937, %v938
    %v940 = vld [vmem:[#allocation2 + $0x30] sm:$0xff]
    %v941 = vpack.c.bf16 %v939, %v939
    %942 = vmatpush.bf16.msra.mxu0 %v729
    %943 = vmatpush.bf16.msra.mxu0 %v728
    %944 = vmatpush.bf16.msra.mxu0 %v727
    %945 = vmatpush.bf16.msra.mxu0 %v726
    %946 = vmatpush.bf16.msra.mxu0 %v725
    %947 = vmatpush.bf16.msra.mxu0 %v724
    %948 = vmatpush.bf16.msra.mxu0 %v723
    %949 = vmatpush.bf16.msra.mxu0 %v722
    %950 = vmatmul.bf16.gmra.mxu0 %v941
    %v951 = vpop.f32.mrf.mxu0
    %v952 = vadd.f32 0.0, %v951
    %v953 = vpop.f32.mrf.mxu0
    %954 = vdwg.mxu0
    %v955 = vadd.f32 %v940, %v952
    %v956 = vtanh.pop %v955
    %957 = vrot.lane.b32.xlu0 %v956, 96
    %v958 = vpop.permute.xlu0 %957
    %959 = vrot.lane.b32.xlu0 %v956, 64
    %v960 = vpop.permute.xlu0 %959
    %961 = vrot.lane.b32.xlu0 %v956, 32
    %v962 = vpop.permute.xlu0 %961
    %v963 = vmul.f32 %v958, 0.5
    %v964 = vadd.f32 %v963, 0.5
    %v965 = vmul.f32 %v964, %v935
    %v966 = vmul.f32 %v956, 0.5
    %v967 = vadd.f32 %v966, 0.5
    %v968 = vmul.f32 %v967, %v960
    %v969 = vadd.f32 %v965, %v968
    %v970 = vmul.f32 %v962, 0.5
    %v971 = vadd.f32 %v970, 0.5
    %v972 = vtanh.pop %v969
    %v973 = vmul.f32 %v971, %v972
    %v974 = vld [vmem:[#allocation2 + $0x38] sm:$0xff]
    %v975 = vpack.c.bf16 %v973, %v973
    %976 = vmatpush.bf16.msra.mxu0 %v729
    %977 = vmatpush.bf16.msra.mxu0 %v728
    %978 = vmatpush.bf16.msra.mxu0 %v727
    %979 = vmatpush.bf16.msra.mxu0 %v726
    %980 = vmatpush.bf16.msra.mxu0 %v725
    %981 = vmatpush.bf16.msra.mxu0 %v724
    %982 = vmatpush.bf16.msra.mxu0 %v723
    %983 = vmatpush.bf16.msra.mxu0 %v722
    %984 = vmatmul.bf16.gmra.mxu0 %v975
    %v985 = vpop.f32.mrf.mxu0
    %v986 = vadd.f32 0.0, %v985
    %v987 = vpop.f32.mrf.mxu0
    %988 = vdwg.mxu0
    %v989 = vadd.f32 %v974, %v986
    %v990 = vtanh.pop %v989
    %991 = vrot.lane.b32.xlu0 %v990, 96
    %v992 = vpop.permute.xlu0 %991
    %993 = vrot.lane.b32.xlu0 %v990, 64
    %v994 = vpop.permute.xlu0 %993
    %995 = vrot.lane.b32.xlu0 %v990, 32
    %v996 = vpop.permute.xlu0 %995
    %v997 = vmul.f32 %v992, 0.5
    %v998 = vadd.f32 %v997, 0.5
    %v999 = vmul.f32 %v998, %v969
    %v1000 = vmul.f32 %v990, 0.5
    %v1001 = vadd.f32 %v1000, 0.5
    %v1002 = vmul.f32 %v1001, %v994
    %v1003 = vadd.f32 %v999, %v1002
    %v1004 = vmul.f32 %v996, 0.5
    %v1005 = vadd.f32 %v1004, 0.5
    %v1006 = vtanh.pop %v1003
    %v1007 = vmul.f32 %v1005, %v1006
    %v1008 = vld [vmem:[#allocation9] sm:$0xff]
    %v1009 = vld [vmem:[#allocation9 + $0x8] sm:$0xff]
    %v1010 = vld [vmem:[#allocation9 + $0x10] sm:$0xff]
    %v1011 = vld [vmem:[#allocation9 + $0x18] sm:$0xff]
    %v1012 = vld [vmem:[#allocation9 + $0x20] sm:$0xff]
    %v1013 = vld [vmem:[#allocation9 + $0x28] sm:$0xff]
    %v1014 = vld [vmem:[#allocation9 + $0x30] sm:$0xff]
    %v1015 = vld [vmem:[#allocation9 + $0x38] sm:$0xff]
    %v1016 = vld [vmem:[#allocation9 + $0x40] sm:$0xff]
    %v1017 = vld [vmem:[#allocation9 + $0x48] sm:$0xff]
    %v1018 = vld [vmem:[#allocation9 + $0x50] sm:$0xff]
    %v1019 = vld [vmem:[#allocation9 + $0x58] sm:$0xff]
    %v1020 = vld [vmem:[#allocation9 + $0x60] sm:$0xff]
    %v1021 = vld [vmem:[#allocation9 + $0x68] sm:$0xff]
    %v1022 = vld [vmem:[#allocation9 + $0x70] sm:$0xff]
    %v1023 = vld [vmem:[#allocation9 + $0x78] sm:$0xff]
    %v1024 = vld [vmem:[%s8] sm:$0x1]
    %v1026 = vperm.slane %v1024, 0
    %1028 = vmatpush.msra.mxu0 %v1023
    %1029 = vmatpush.msra.mxu0 %v1022
    %1030 = vmatpush.msra.mxu0 %v1021
    %1031 = vmatpush.msra.mxu0 %v1020
    %1032 = vmatpush.msra.mxu0 %v1019
    %1033 = vmatpush.msra.mxu0 %v1018
    %1034 = vmatpush.msra.mxu0 %v1017
    %1035 = vmatpush.msra.mxu0 %v1016
    %1036 = vmatpush.msra.mxu0 %v1015
    %1037 = vmatpush.msra.mxu0 %v1014
    %1038 = vmatpush.msra.mxu0 %v1013
    %1039 = vmatpush.msra.mxu0 %v1012
    %1040 = vmatpush.msra.mxu0 %v1011
    %1041 = vmatpush.msra.mxu0 %v1010
    %1042 = vmatpush.msra.mxu0 %v1009
    %1043 = vmatpush.msra.mxu0 %v1008
    %1044 = vmatmul.f32.gmra.mxu0 %v1007
    %v1045 = vpop.f32.mrf.mxu0
    %v1046 = vadd.f32 %v1026, %v1045
    %1047 = vdwg.mxu0
    %1048 = vst [vmem:[%s9] sm:$0xff] %v1046
    // Predicated region
    $region54: #{lstm_regressor_forward.1} parent=1 // pred_check
      _
    $region55: #{lstm_regressor_forward.1} parent=1 // pred_check_branch
      %1050 = sbr.rel (0) target = $region57
    $region56: #{lstm_regressor_forward.1} parent=1 // pred_region
      _
    $region57: #{lstm_regressor_forward.1} parent=1 // pred_fallthru
      _
    // Predicated region
    $region58: #{lstm_regressor_forward.1} parent=1 // pred_check
      _
    $region59: #{lstm_regressor_forward.1} parent=1 // pred_check_branch
      %1052 = sbr.rel (0) target = $region61
    $region60: #{lstm_regressor_forward.1} parent=1 // pred_region
      _
    $region61: #{lstm_regressor_forward.1} parent=1 // pred_fallthru
      _
    %1053 = vsyncpa [#allocation5], 1
    %1054 = vsyncpa [#allocation7], 1
    %1055 = vsyncpa [#allocation10], 1

</llo_original>
